<compile_context>
chip_gen: v7x
topology: tpu7x:2x2x1
jax: 0.10.0
libtpu: 0.0.40
codegen_flags: <defaults>
</compile_context>

<pallas_src>
import math

import jax
import jax.numpy as jnp
from jax.experimental import pallas as pl
from jax.experimental.pallas import tpu as pltpu


# ----------------------------------------------------------------------------
# Kernels
# ----------------------------------------------------------------------------

def _planar_kernel_plain(scal_ref, x_ref, w_ref, u_ref, z_ref, ld_ref):
    """Plain row layout: x tile (tm, D); rows on sublanes, features on lanes.

    Used when D >= 128 (or D does not pack cleanly into 128 lanes). The (tm, 1) log_det
    store is lane-sparse but carries <1% of the bytes and the store slot stays under the
    HBM shadow at these block sizes, so no in-kernel relayout/transpose is attempted.
    """
    b = scal_ref[0]
    wu_hat = scal_ref[1]          # precomputed w . u_hat

    x = x_ref[...].astype(jnp.float32)   # (tm, D) -- upcast in-register if bf16
    w = w_ref[...]                       # (1, D) f32
    u = u_ref[...]                       # (1, D) f32  == u_hat

    # Per-row reduce on the VPU/XLU; kernel is HBM-bound at these tile sizes.
    lin = jnp.sum(x * w, axis=-1, keepdims=True) + b      # (tm, 1)
    t = jnp.tanh(lin)                                     # (tm, 1)

    z_ref[...] = (x + u * t).astype(z_ref.dtype)
    # phi @ u_hat == (1 - t^2) * (w . u_hat): per-row scalar times a constant.
    ld_ref[...] = jnp.log(jnp.abs(1.0 + (1.0 - t * t) * wu_hat))


def _planar_kernel_packed(scal_ref, x_ref, w_ref, u_ref, ssum_ref, bc_ref,
                          z_ref, ld_ref):
    """Packed layout for small D: P = 128 // D logical rows per 128-lane vreg row.

    x tile is (tm, 128). Constant 0/1 matrices do the per-logical-row work on the MXU:
      ssum (128, P): ssum[j, k] = 1 iff j // D == k   (segment sum -> one lin per logical row)
      bc   (P, 128): bc[k, j]   = 1 iff j // D == k   (broadcast tanh back across each segment)
    tanh commutes with the 0/1 broadcast, so only P lanes per packed row hit the EUP.
    HIGHEST precision keeps the 0/1 matmuls exact in f32; they are tiny (K or N == P).
    """
    b = scal_ref[0]
    wu_hat = scal_ref[1]

    x = x_ref[...].astype(jnp.float32)   # (tm, 128)
    w = w_ref[...]                       # (1, 128) f32  == tile(w, P)
    u = u_ref[...]                       # (1, 128) f32  == tile(u_hat, P)

    red = x * w                          # (tm, 128) -- VPU

    lin_s = jnp.dot(red, ssum_ref[...], preferred_element_type=jnp.float32,
                    precision=jax.lax.Precision.HIGHEST) + b     # (tm, P)
    t_s = jnp.tanh(lin_s)                                        # (tm, P) -- single P-lane tanh
    t_b = jnp.dot(t_s, bc_ref[...], preferred_element_type=jnp.float32,
                  precision=jax.lax.Precision.HIGHEST)           # (tm, 128) -- 0/1 broadcast

    z_ref[...] = (x + u * t_b).astype(z_ref.dtype)               # lane-dense store
    ld_ref[...] = jnp.log(jnp.abs(1.0 + (1.0 - t_s * t_s) * wu_hat))


# ----------------------------------------------------------------------------
# Wrapper
# ----------------------------------------------------------------------------

def _round_up(x, m):
    return ((x + m - 1) // m) * m


def _choose_rows(n_rows, row_bytes, target_bytes, row_align):
    """Row-tile size: multiple of `row_align` sublanes, one block <= target_bytes, and at
    least 2 grid steps whenever possible (dual v7x TensorCores + DMA/compute overlap).
    The grid uses pl.cdiv, so n_rows need not divide the tile (Pallas pads the last block).
    """
    max_rows = max(row_align,
                   (target_bytes // max(1, row_bytes)) // row_align * row_align)
    if n_rows <= row_align:
        return n_rows                      # single full-extent block (full-dim rule)
    half = _round_up((n_rows + 1) // 2, row_align)
    return min(max_rows, half)


def _u_hat_params(w, u):
    """Module's tanh-branch correction; log(1/exp(wu)+1) == softplus(-wu) (stable)."""
    wu = jnp.dot(w, u)
    scal = wu * jax.nn.softplus(-wu) - wu - 1.0
    u_hat = u + scal * w / jnp.linalg.norm(w)
    wu_hat = jnp.dot(w, u_hat)
    return u_hat, wu_hat


def planar_forward(x, w, u, b, *, block_target_bytes=4 * 1024 * 1024,
                   min_pallas_bytes=64 * 1024):
    """Planar flow forward. x: (N, D); w, u: (D,); b: scalar (or (1,)).

    Returns (z, log_det) with z in x's dtype (f32 or bf16) and log_det in f32.
    """
    if x.dtype not in (jnp.float32, jnp.bfloat16):
        x = x.astype(jnp.float32)
    x_dtype = x.dtype
    w = w.astype(jnp.float32)
    u = u.astype(jnp.float32)
    b_scalar = jnp.asarray(b, jnp.float32).reshape(())
    N, D = x.shape
    itemsize = jnp.dtype(x_dtype).itemsize

    # Parameter-only glue (O(D)) in plain JAX.
    u_hat, wu_hat = _u_hat_params(w, u)

    # Tiny problems: kernel launch + DMA fixed costs dominate -> let XLA fuse it.
    if N * D * itemsize < min_pallas_bytes:
        xf = x.astype(jnp.float32)
        lin = (xf @ w)[:, None] + b_scalar
        t = jnp.tanh(lin)
        z = (xf + u_hat[None, :] * t).astype(x_dtype)
        log_det = jnp.log(jnp.abs(1.0 + (1.0 - t[:, 0] ** 2) * wu_hat))
        return z, log_det

    scalars = jnp.stack([b_scalar, wu_hat]).astype(jnp.float32)   # SMEM: [b, w.u_hat]
    smem_spec = pl.BlockSpec(memory_space=pltpu.MemorySpace.SMEM)
    row_align = 16 if x_dtype == jnp.bfloat16 else 8              # (16,128)/(8,128) tiles

    cparams = pltpu.CompilerParams(
        dimension_semantics=("parallel",),
        # ~4x block (double-buffered x in + z out) stays well under this on every
        # generation, including v7x's 64 MiB physical VMEM.
        vmem_limit_bytes=40 * 1024 * 1024,
    )

    pack = (D < 128) and (128 % D == 0) and (N % (128 // D) == 0)

    if pack:
        P = 128 // D
        Np = N // P
        xp = x.reshape(Np, 128)                          # row-major repack, lane dense
        w_row = jnp.tile(w.reshape(1, D), (1, P))        # (1, 128)
        u_row = jnp.tile(u_hat.reshape(1, D), (1, P))    # (1, 128)
        seg = jnp.arange(128) // D
        ssum = (seg[:, None] == jnp.arange(P)[None, :]).astype(jnp.float32)   # (128, P)
        bc = (jnp.arange(P)[:, None] == seg[None, :]).astype(jnp.float32)     # (P, 128)

        tm = _choose_rows(Np, 128 * itemsize, block_target_bytes, row_align)
        grid = (pl.cdiv(Np, tm),)

        cost = pl.CostEstimate(flops=8 * N * D, transcendentals=2 * N,
                               bytes_accessed=2 * N * D * itemsize + 4 * N)

        z_p, ld_p = pl.pallas_call(
            _planar_kernel_packed,
            out_shape=(
                jax.ShapeDtypeStruct((Np, 128), x_dtype),
                jax.ShapeDtypeStruct((Np, P), jnp.float32),
            ),
            grid_spec=pltpu.PrefetchScalarGridSpec(
                num_scalar_prefetch=0,
                grid=grid,
                in_specs=[
                    smem_spec,                                   # [b, w.u_hat] scalars
                    pl.BlockSpec((tm, 128), lambda i: (i, 0)),   # x (packed, lane dense)
                    pl.BlockSpec((1, 128), lambda i: (0, 0)),    # w (tiled)
                    pl.BlockSpec((1, 128), lambda i: (0, 0)),    # u_hat (tiled)
                    pl.BlockSpec((128, P), lambda i: (0, 0)),    # segment-sum matrix
                    pl.BlockSpec((P, 128), lambda i: (0, 0)),    # segment-broadcast matrix
                ],
                out_specs=[
                    pl.BlockSpec((tm, 128), lambda i: (i, 0)),   # z (packed, lane dense)
                    pl.BlockSpec((tm, P), lambda i: (i, 0)),     # log_det (packed)
                ],
            ),
            compiler_params=cparams,
            cost_estimate=cost,
        )(scalars, xp, w_row, u_row, ssum, bc)

        return z_p.reshape(N, D), ld_p.reshape(N)

    # Plain layout (D >= 128, or D / N do not pack cleanly into 128 lanes).
    w_row = w.reshape(1, D)
    u_row = u_hat.reshape(1, D)
    tm = _choose_rows(N, D * itemsize, block_target_bytes, row_align)
    grid = (pl.cdiv(N, tm),)

    cost = pl.CostEstimate(flops=4 * N * D, transcendentals=2 * N,
                           bytes_accessed=2 * N * D * itemsize + 4 * N)

    z, ld = pl.pallas_call(
        _planar_kernel_plain,
        out_shape=(
            jax.ShapeDtypeStruct((N, D), x_dtype),
            jax.ShapeDtypeStruct((N, 1), jnp.float32),
        ),
        grid_spec=pltpu.PrefetchScalarGridSpec(
            num_scalar_prefetch=0,
            grid=grid,
            in_specs=[
                smem_spec,                                  # [b, w.u_hat] scalars
                pl.BlockSpec((tm, D), lambda i: (i, 0)),    # x tile
                pl.BlockSpec((1, D), lambda i: (0, 0)),     # w
                pl.BlockSpec((1, D), lambda i: (0, 0)),     # u_hat
            ],
            out_specs=[
                pl.BlockSpec((tm, D), lambda i: (i, 0)),    # z tile
                pl.BlockSpec((tm, 1), lambda i: (i, 0)),    # log_det tile
            ],
        ),
        compiler_params=cparams,
        cost_estimate=cost,
    )(scalars, x, w_row, u_row)

    return z, ld[:, 0]


# ----------------------------------------------------------------------------
# Pure-JAX reference mirroring the PyTorch forward (tanh branch)
# ----------------------------------------------------------------------------

def planar_reference(x, w, u, b):
    x = x.astype(jnp.float32)
    w = w.astype(jnp.float32)
    u = u.astype(jnp.float32)
    wu = jnp.dot(w, u)
    # Identical to torch.log(1/exp(wu) + 1) but stable for large |wu| (softplus identity).
    scal = wu * jax.nn.softplus(-wu) - wu - 1.0
    u_hat = u + scal * w / jnp.linalg.norm(w)
    lin = (x @ w)[:, None] + jnp.asarray(b, jnp.float32)
    t = jnp.tanh(lin)
    z = x + u_hat * t
    phi = (1.0 - t ** 2) * w
    log_det = jnp.log(jnp.abs(1.0 + phi @ u_hat))
    return z, log_det


if __name__ == "__main__":
    key = jax.random.PRNGKey(0)

    def _init(k, N, D, dtype):
        kx, kw, ku, kb = jax.random.split(k, 4)
        bound = math.sqrt(1.0 / D)
        w = jax.random.uniform(kw, (D,), jnp.float32, -bound, bound)
        u = jax.random.uniform(ku, (D,), jnp.float32, -bound, bound)
        b = jax.random.uniform(kb, (), jnp.float32, -bound, bound)
        x = jax.random.normal(kx, (N, D), jnp.float32).astype(dtype)
        return x, w, u, b

    # (N, D, dtype, block_target_bytes): exercises jnp short-circuit, packed + plain paths,
    # multi-step pipelined grids, partial (cdiv) last blocks, and bf16 passthrough.
    cases = [
        (8, 32, jnp.float32, 4 << 20),        # module usage: Planar(dim=32), tiny batch -> XLA path
        (512, 32, jnp.float32, 4 << 20),      # packed path, grid of 2
        (4096, 32, jnp.float32, 64 << 10),    # packed path, pipelined grid of 8
        (1000, 32, jnp.float32, 64 << 10),    # packed path, cdiv grid with partial last block
        (2048, 32, jnp.bfloat16, 4 << 20),    # packed path, bf16 in / bf16 z out
        (256, 256, jnp.float32, 4 << 20),     # plain path, grid of 2
        (1000, 256, jnp.float32, 128 << 10),  # plain path, cdiv grid with partial last block
    ]
    keys = jax.random.split(key, len(cases))
    for (N, D, dtype, tgt), k in zip(cases, keys):
        x, w, u, b = _init(k, N, D, dtype)
        z, log_det = planar_forward(x, w, u, b, block_target_bytes=tgt)
        jax.block_until_ready((z, log_det))

        z_ref, ld_ref = planar_reference(x, w, u, b)
        assert z.shape == (N, D) and log_det.shape == (N,)
        assert z.dtype == x.dtype
        if dtype == jnp.bfloat16:
            z_tol = dict(atol=2e-2, rtol=2e-2)   # z is rounded to bf16 on output
        else:
            z_tol = dict(atol=1e-5, rtol=1e-5)
        assert jnp.allclose(z.astype(jnp.float32), z_ref, **z_tol), \
            f"z mismatch (N={N}, D={D}, dtype={dtype})"
        assert jnp.allclose(log_det, ld_ref, atol=1e-5, rtol=1e-5), \
            f"log_det mismatch (N={N}, D={D}, dtype={dtype})"

    print("KERNEL_OK")
</pallas_src>

<mosaic_0001>
module attributes {stable_mosaic.version = 11 : i64} {
  func.func @_planar_kernel_packed(%arg0: i32, %arg1: memref<2xf32, #tpu.memory_space<smem>>, %arg2: memref<64x128xf32, #tpu.memory_space<vmem>>, %arg3: memref<1x128xf32, #tpu.memory_space<vmem>>, %arg4: memref<1x128xf32, #tpu.memory_space<vmem>>, %arg5: memref<128x4xf32, #tpu.memory_space<vmem>>, %arg6: memref<4x128xf32, #tpu.memory_space<vmem>>, %arg7: memref<64x128xf32, #tpu.memory_space<vmem>>, %arg8: memref<64x4xf32, #tpu.memory_space<vmem>>) attributes {dimension_semantics = [#tpu.dimension_semantics<parallel>], iteration_bounds = array<i64: 2>, scalar_prefetch = 0 : i64, scratch_operands = 0 : i64, tpu.core_type = #tpu.core_type<tc>, window_params = [{transform_indices = @transform_0, window_bounds = array<i64: 2>}, {transform_indices = @transform_1, window_bounds = array<i64: 64, 128>}, {pipeline_mode = #tpu.pipeline_mode<synchronous>, transform_indices = @transform_2, window_bounds = array<i64: 1, 128>}, {pipeline_mode = #tpu.pipeline_mode<synchronous>, transform_indices = @transform_3, window_bounds = array<i64: 1, 128>}, {pipeline_mode = #tpu.pipeline_mode<synchronous>, transform_indices = @transform_4, window_bounds = array<i64: 128, 4>}, {pipeline_mode = #tpu.pipeline_mode<synchronous>, transform_indices = @transform_5, window_bounds = array<i64: 4, 128>}, {transform_indices = @transform_6, window_bounds = array<i64: 64, 128>}, {transform_indices = @transform_7, window_bounds = array<i64: 64, 4>}]} {
    %c0 = arith.constant 0 : index
    %0 = memref.load %arg1[%c0] : memref<2xf32, #tpu.memory_space<smem>>
    %c1 = arith.constant 1 : index
    %1 = memref.load %arg1[%c1] : memref<2xf32, #tpu.memory_space<smem>>
    %c0_0 = arith.constant 0 : index
    %c0_1 = arith.constant 0 : index
    %2 = vector.load %arg2[%c0_0, %c0_1] : memref<64x128xf32, #tpu.memory_space<vmem>>, vector<64x128xf32>
    %c0_2 = arith.constant 0 : index
    %c0_3 = arith.constant 0 : index
    %3 = vector.load %arg3[%c0_2, %c0_3] : memref<1x128xf32, #tpu.memory_space<vmem>>, vector<1x128xf32>
    %c0_4 = arith.constant 0 : index
    %c0_5 = arith.constant 0 : index
    %4 = vector.load %arg4[%c0_4, %c0_5] : memref<1x128xf32, #tpu.memory_space<vmem>>, vector<1x128xf32>
    %5 = vector.broadcast %3 : vector<1x128xf32> to vector<64x128xf32>
    %6 = arith.mulf %2, %5 : vector<64x128xf32>
    %c0_6 = arith.constant 0 : index
    %c0_7 = arith.constant 0 : index
    %7 = vector.load %arg5[%c0_6, %c0_7] : memref<128x4xf32, #tpu.memory_space<vmem>>, vector<128x4xf32>
    %cst = arith.constant dense<0.000000e+00> : vector<64x4xf32>
    %8 = tpu.matmul %6, %7, %cst {dimension_numbers = #tpu.dot_dimension_numbers<[1], [0], [0], [1], [0, 0, 1, 1], [], []>, precision = #tpu.contract_precision<fp32>} : vector<64x128xf32>, vector<128x4xf32>, vector<64x4xf32> -> vector<64x4xf32>
    %9 = vector.broadcast %0 : f32 to vector<64x4xf32>
    %10 = arith.addf %8, %9 : vector<64x4xf32>
    %11 = math.tanh %10 : vector<64x4xf32>
    %c0_8 = arith.constant 0 : index
    %c0_9 = arith.constant 0 : index
    %12 = vector.load %arg6[%c0_8, %c0_9] : memref<4x128xf32, #tpu.memory_space<vmem>>, vector<4x128xf32>
    %cst_10 = arith.constant dense<0.000000e+00> : vector<64x128xf32>
    %13 = tpu.matmul %11, %12, %cst_10 {dimension_numbers = #tpu.dot_dimension_numbers<[1], [0], [0], [1], [0, 0, 1, 1], [], []>, precision = #tpu.contract_precision<fp32>} : vector<64x4xf32>, vector<4x128xf32>, vector<64x128xf32> -> vector<64x128xf32>
    %14 = vector.broadcast %4 : vector<1x128xf32> to vector<64x128xf32>
    %15 = arith.mulf %14, %13 : vector<64x128xf32>
    %16 = arith.addf %2, %15 : vector<64x128xf32>
    %c0_11 = arith.constant 0 : index
    %c0_12 = arith.constant 0 : index
    %17 = vector.load %arg7[%c0_11, %c0_12] : memref<64x128xf32, #tpu.memory_space<vmem>>, vector<64x128xf32>
    tpu.vector_store %arg7[%c0_11, %c0_12], %16 {strides = array<i32>} : memref<64x128xf32, #tpu.memory_space<vmem>>, vector<64x128xf32>,
    %18 = arith.mulf %11, %11 : vector<64x4xf32>
    %cst_13 = arith.constant 1.000000e+00 : f32
    %19 = vector.broadcast %cst_13 : f32 to vector<64x4xf32>
    %20 = arith.subf %19, %18 : vector<64x4xf32>
    %21 = vector.broadcast %1 : f32 to vector<64x4xf32>
    %22 = arith.mulf %20, %21 : vector<64x4xf32>
    %cst_14 = arith.constant 1.000000e+00 : f32
    %23 = vector.broadcast %cst_14 : f32 to vector<64x4xf32>
    %24 = arith.addf %23, %22 : vector<64x4xf32>
    %25 = math.absf %24 : vector<64x4xf32>
    %26 = math.log %25 : vector<64x4xf32>
    %c0_15 = arith.constant 0 : index
    %c0_16 = arith.constant 0 : index
    %27 = vector.load %arg8[%c0_15, %c0_16] : memref<64x4xf32, #tpu.memory_space<vmem>>, vector<64x4xf32>
    tpu.vector_store %arg8[%c0_15, %c0_16], %26 {strides = array<i32>} : memref<64x4xf32, #tpu.memory_space<vmem>>, vector<64x4xf32>,
    return
  }
  func.func @transform_0(%arg0: i32) -> i32 {
    %c0_i32 = arith.constant 0 : i32
    %c0_i32_0 = arith.constant 0 : i32
    return %c0_i32 : i32
  }
  func.func @transform_1(%arg0: i32) -> (i32, i32) {
    %c0_i32 = arith.constant 0 : i32
    %c0_i32_0 = arith.constant 0 : i32
    return %arg0, %c0_i32 : i32, i32
  }
  func.func @transform_2(%arg0: i32) -> (i32, i32) {
    %c0_i32 = arith.constant 0 : i32
    %c0_i32_0 = arith.constant 0 : i32
    %c0_i32_1 = arith.constant 0 : i32
    return %c0_i32, %c0_i32_0 : i32, i32
  }
  func.func @transform_3(%arg0: i32) -> (i32, i32) {
    %c0_i32 = arith.constant 0 : i32
    %c0_i32_0 = arith.constant 0 : i32
    %c0_i32_1 = arith.constant 0 : i32
    return %c0_i32, %c0_i32_0 : i32, i32
  }
  func.func @transform_4(%arg0: i32) -> (i32, i32) {
    %c0_i32 = arith.constant 0 : i32
    %c0_i32_0 = arith.constant 0 : i32
    %c0_i32_1 = arith.constant 0 : i32
    return %c0_i32, %c0_i32_0 : i32, i32
  }
  func.func @transform_5(%arg0: i32) -> (i32, i32) {
    %c0_i32 = arith.constant 0 : i32
    %c0_i32_0 = arith.constant 0 : i32
    %c0_i32_1 = arith.constant 0 : i32
    return %c0_i32, %c0_i32_0 : i32, i32
  }
  func.func @transform_6(%arg0: i32) -> (i32, i32) {
    %c0_i32 = arith.constant 0 : i32
    %c0_i32_0 = arith.constant 0 : i32
    return %arg0, %c0_i32 : i32, i32
  }
  func.func @transform_7(%arg0: i32) -> (i32, i32) {
    %c0_i32 = arith.constant 0 : i32
    %c0_i32_0 = arith.constant 0 : i32
    return %arg0, %c0_i32 : i32, i32
  }
}

</mosaic_0001>

<llo_original>
// kernel: tpu_custom_call.1
$region0: #{tpu_custom_call.1}
  #allocation0 [shape = 'u32[]', space=smem, size = 0x4, offset = 0x4, fixed_abs, tag = 'smem constant byte address 0x4 - core index']
  #allocation1 [shape = 'u32[144,128]{1,0:T(1,128)}', space=vmem, size = 0x12000, scoped, tag = 'internal scratch']
  %s0 = inlined_call_operand.vmem [shape: f32[2], index: 0, kind: input, shape index: {}]
  %s1 = inlined_call_operand.vmem [shape: f32[128,128], index: 1, kind: input, shape index: {}]
  %s2 = inlined_call_operand.vmem [shape: f32[1,128], index: 2, kind: input, shape index: {}]
  %s3 = inlined_call_operand.vmem [shape: f32[1,128], index: 3, kind: input, shape index: {}]
  %s4 = inlined_call_operand.vmem [shape: f32[128,4], index: 4, kind: input, shape index: {}]
  %s5 = inlined_call_operand.vmem [shape: f32[4,128], index: 5, kind: input, shape index: {}]
  %s6 = inlined_call_operand.hbm [shape: f32[128,128], index: 6, kind: output, shape index: {0}]
  %s7 = inlined_call_operand.vmem [shape: f32[128,4], index: 7, kind: output, shape index: {1}]
  %8 = xla_tuple %s6, %s7
  %s9 = sld [smem:[#allocation0]]
  $region69: #{tpu_custom_call.1} parent=0
    _
  %s11 = ssub.s32 1, %s9
  %s12 = scalar_select 0, %s11, %s9
  $region1: #{tpu_custom_call.1} parent=0
    #allocation2 [shape = 'u8[512]{0}', space=smem, size = 0x200, scoped, tag = 'input window, operand 0, single buffered']
    #allocation3 [shape = 's32[2]{0}', space=sflag, size = 0x8, scoped, tag = 'scoped memory for tpu_custom_call.1']
    #allocation4 [shape = 's32[2]{0}', space=sflag, size = 0x8, scoped, tag = 'scoped memory for tpu_custom_call.1']
    #allocation5 [shape = 'u8[65536]{0}', space=vmem, size = 0x10000, scoped, tag = 'output window, operand 0']
    %13 = vsyncpa [#allocation4], 0
    %14 = vsyncpa [#allocation3], 0
    %s15 = scalar_lea.sflag [#allocation3], 1
    %16 = vsyncpa %s15, 0
    loop: start=0, step=1, limit=4
    $region2: #{tpu_custom_call.1} parent=1 // loop_pre_header
      _
    $region3: #{tpu_custom_call.1} parent=1 // loop_header
      %s18 = sphi 0, %s22
      %p19 = scmp.ge.s32.totalorder %s18, 4
      %s26 = sphi 0, %s26
      %s28 = sphi 0, %s26
      %s29 = sphi 0, %s28
      %s43 = sphi 0, %s29
      %s49 = sphi 0, %s51
      %s52 = sphi 0, %s49
      %s53 = sphi 0, %s52
      %s69 = sphi 0, %s53
      %s73 = sphi 0, %s73
      %s75 = sphi 0, %s73
      %s76 = sphi 0, %s75
      %s90 = sphi 0, %s76
      %s94 = sphi 0, %s94
      %s96 = sphi 0, %s94
      %s97 = sphi 0, %s96
      %s111 = sphi 0, %s97
      %s115 = sphi 0, %s115
      %s117 = sphi 0, %s115
      %s118 = sphi 0, %s117
      %s132 = sphi 0, %s118
      %s136 = sphi 0, %s136
      %s138 = sphi 0, %s136
      %s139 = sphi 0, %s138
      %s153 = sphi 0, %s139
      %s159 = sphi 0, %s161
      %s162 = sphi 0, %s159
      %s163 = sphi 0, %s162
      %s179 = sphi 0, %s163
      %s185 = sphi 0, %s187
      %s188 = sphi 0, %s185
      %s189 = sphi 0, %s188
      %s205 = sphi 0, %s189
    $region4: #{tpu_custom_call.1} parent=1 // loop_header_branch
      %21 = sbr.rel (%p19) target = $region8
    $region5: #{tpu_custom_call.1} parent=1 // loop_body
      %s23 = ssub.s32 %s18, 1
      %s24 = ssub.s32 %s18, 2
      %s25 = sadd.s32 %s18, 1
      %s27 = sadd.s32 %s26, 1
      %p30 = scmp.eq.s32.totalorder %s18, 1
      %p31 = scmp.ne.s32.totalorder %s26, %s28
      %p32 = scmp.eq.s32.totalorder %s18, 0
      %p33 = por %p31, %p32
      %p34 = scmp.ne.s32.totalorder %s26, %s28
      %p35 = scmp.eq.s32.totalorder %s23, 1
      %p36 = por %p34, %p35
      %p37 = scmp.ne.s32.totalorder %s28, %s29
      %p38 = scmp.eq.s32.totalorder %s23, 0
      %p39 = por %p37, %p38
      %p40 = scmp.ne.s32.totalorder %s28, %s29
      %p41 = scmp.eq.s32.totalorder %s24, 1
      %p42 = por %p40, %p41
      %p44 = scmp.ne.s32.totalorder %s29, %s43
      %p45 = scmp.eq.s32.totalorder %s24, 0
      %p46 = por %p44, %p45
      %s47 = ssub.s32 %s18, %s25
      %p48 = scmp.eq.s32.totalorder %s47, 0
      %s50 = sadd.s32 %s49, 1
      %s51 = scalar_select %p48, %s49, %s50
      %p54 = pneg %p48
      %p55 = scmp.eq.s32.totalorder %s18, 1
      %p56 = por %p54, %p55
      %p57 = scmp.ne.s32.totalorder %s49, %s52
      %p58 = scmp.eq.s32.totalorder %s18, 0
      %p59 = por %p57, %p58
      %p60 = scmp.ne.s32.totalorder %s49, %s52
      %p61 = scmp.eq.s32.totalorder %s23, 1
      %p62 = por %p60, %p61
      %p63 = scmp.ne.s32.totalorder %s52, %s53
      %p64 = scmp.eq.s32.totalorder %s23, 0
      %p65 = por %p63, %p64
      %p66 = scmp.ne.s32.totalorder %s52, %s53
      %p67 = scmp.eq.s32.totalorder %s24, 1
      %p68 = por %p66, %p67
      %p70 = scmp.ne.s32.totalorder %s53, %s69
      %p71 = scmp.eq.s32.totalorder %s24, 0
      %p72 = por %p70, %p71
      %s74 = sadd.s32 %s73, 1
      %p77 = scmp.eq.s32.totalorder %s18, 1
      %p78 = scmp.ne.s32.totalorder %s73, %s75
      %p79 = scmp.eq.s32.totalorder %s18, 0
      %p80 = por %p78, %p79
      %p81 = scmp.ne.s32.totalorder %s73, %s75
      %p82 = scmp.eq.s32.totalorder %s23, 1
      %p83 = por %p81, %p82
      %p84 = scmp.ne.s32.totalorder %s75, %s76
      %p85 = scmp.eq.s32.totalorder %s23, 0
      %p86 = por %p84, %p85
      %p87 = scmp.ne.s32.totalorder %s75, %s76
      %p88 = scmp.eq.s32.totalorder %s24, 1
      %p89 = por %p87, %p88
      %p91 = scmp.ne.s32.totalorder %s76, %s90
      %p92 = scmp.eq.s32.totalorder %s24, 0
      %p93 = por %p91, %p92
      %s95 = sadd.s32 %s94, 1
      %p98 = scmp.eq.s32.totalorder %s18, 1
      %p99 = scmp.ne.s32.totalorder %s94, %s96
      %p100 = scmp.eq.s32.totalorder %s18, 0
      %p101 = por %p99, %p100
      %p102 = scmp.ne.s32.totalorder %s94, %s96
      %p103 = scmp.eq.s32.totalorder %s23, 1
      %p104 = por %p102, %p103
      %p105 = scmp.ne.s32.totalorder %s96, %s97
      %p106 = scmp.eq.s32.totalorder %s23, 0
      %p107 = por %p105, %p106
      %p108 = scmp.ne.s32.totalorder %s96, %s97
      %p109 = scmp.eq.s32.totalorder %s24, 1
      %p110 = por %p108, %p109
      %p112 = scmp.ne.s32.totalorder %s97, %s111
      %p113 = scmp.eq.s32.totalorder %s24, 0
      %p114 = por %p112, %p113
      %s116 = sadd.s32 %s115, 1
      %p119 = scmp.eq.s32.totalorder %s18, 1
      %p120 = scmp.ne.s32.totalorder %s115, %s117
      %p121 = scmp.eq.s32.totalorder %s18, 0
      %p122 = por %p120, %p121
      %p123 = scmp.ne.s32.totalorder %s115, %s117
      %p124 = scmp.eq.s32.totalorder %s23, 1
      %p125 = por %p123, %p124
      %p126 = scmp.ne.s32.totalorder %s117, %s118
      %p127 = scmp.eq.s32.totalorder %s23, 0
      %p128 = por %p126, %p127
      %p129 = scmp.ne.s32.totalorder %s117, %s118
      %p130 = scmp.eq.s32.totalorder %s24, 1
      %p131 = por %p129, %p130
      %p133 = scmp.ne.s32.totalorder %s118, %s132
      %p134 = scmp.eq.s32.totalorder %s24, 0
      %p135 = por %p133, %p134
      %s137 = sadd.s32 %s136, 1
      %p140 = scmp.eq.s32.totalorder %s18, 1
      %p141 = scmp.ne.s32.totalorder %s136, %s138
      %p142 = scmp.eq.s32.totalorder %s18, 0
      %p143 = por %p141, %p142
      %p144 = scmp.ne.s32.totalorder %s136, %s138
      %p145 = scmp.eq.s32.totalorder %s23, 1
      %p146 = por %p144, %p145
      %p147 = scmp.ne.s32.totalorder %s138, %s139
      %p148 = scmp.eq.s32.totalorder %s23, 0
      %p149 = por %p147, %p148
      %p150 = scmp.ne.s32.totalorder %s138, %s139
      %p151 = scmp.eq.s32.totalorder %s24, 1
      %p152 = por %p150, %p151
      %p154 = scmp.ne.s32.totalorder %s139, %s153
      %p155 = scmp.eq.s32.totalorder %s24, 0
      %p156 = por %p154, %p155
      %s157 = ssub.s32 %s18, %s25
      %p158 = scmp.eq.s32.totalorder %s157, 0
      %s160 = sadd.s32 %s159, 1
      %s161 = scalar_select %p158, %s159, %s160
      %p164 = pneg %p158
      %p165 = scmp.eq.s32.totalorder %s18, 1
      %p166 = por %p164, %p165
      %p167 = scmp.ne.s32.totalorder %s159, %s162
      %p168 = scmp.eq.s32.totalorder %s18, 0
      %p169 = por %p167, %p168
      %p170 = scmp.ne.s32.totalorder %s159, %s162
      %p171 = scmp.eq.s32.totalorder %s23, 1
      %p172 = por %p170, %p171
      %p173 = scmp.ne.s32.totalorder %s162, %s163
      %p174 = scmp.eq.s32.totalorder %s23, 0
      %p175 = por %p173, %p174
      %p176 = scmp.ne.s32.totalorder %s162, %s163
      %p177 = scmp.eq.s32.totalorder %s24, 1
      %p178 = por %p176, %p177
      %p180 = scmp.ne.s32.totalorder %s163, %s179
      %p181 = scmp.eq.s32.totalorder %s24, 0
      %p182 = por %p180, %p181
      %s183 = ssub.s32 %s18, %s25
      %p184 = scmp.eq.s32.totalorder %s183, 0
      %s186 = sadd.s32 %s185, 1
      %s187 = scalar_select %p184, %s185, %s186
      %p190 = pneg %p184
      %p191 = scmp.eq.s32.totalorder %s18, 1
      %p192 = por %p190, %p191
      %p193 = scmp.ne.s32.totalorder %s185, %s188
      %p194 = scmp.eq.s32.totalorder %s18, 0
      %p195 = por %p193, %p194
      %p196 = scmp.ne.s32.totalorder %s185, %s188
      %p197 = scmp.eq.s32.totalorder %s23, 1
      %p198 = por %p196, %p197
      %p199 = scmp.ne.s32.totalorder %s188, %s189
      %p200 = scmp.eq.s32.totalorder %s23, 0
      %p201 = por %p199, %p200
      %p202 = scmp.ne.s32.totalorder %s188, %s189
      %p203 = scmp.eq.s32.totalorder %s24, 1
      %p204 = por %p202, %p203
      %p206 = scmp.ne.s32.totalorder %s189, %s205
      %p207 = scmp.eq.s32.totalorder %s24, 0
      %p208 = por %p206, %p207
      %p209 = scmp.le.s32.totalorder 1, %s18
      %p210 = scmp.lt.s32.totalorder %s18, 3
      %p211 = pnand %p209, %p210
      %p212 = pneg %p211
      // Predicated region
      $region9: #{tpu_custom_call.1} parent=5 // pred_check
        _
      $region10: #{tpu_custom_call.1} parent=5 // pred_check_branch
        %214 = sbr.rel (%p211) target = $region12
      $region11: #{tpu_custom_call.1} parent=5 // pred_region
        %s215 = ssub.s32 %s18, 1
        // Predicated region
        $region13: #{tpu_custom_call.1} parent=11 // pred_check
          %p216 = pneg %p39
        $region14: #{tpu_custom_call.1} parent=11 // pred_check_branch
          %218 = sbr.rel (%p216) target = $region16
        $region15: #{tpu_custom_call.1} parent=11 // pred_region
          %s220 = ssub.s32 16, 16
          %221 = vsyncadd [#allocation4], %s220
          %s223 = sshll.u32 %s0, 4
          %s224 = int_to_ptr.vmem [resolvable:$true] %s223
          %226 = dma.vmem_to_smem %s224, 16, [#allocation2], [#allocation4]
        $region16: #{tpu_custom_call.1} parent=11 // pred_fallthru
          _
        // Predicated region
        $region17: #{tpu_custom_call.1} parent=11 // pred_check
          %p227 = pneg %p86
        $region18: #{tpu_custom_call.1} parent=11 // pred_check_branch
          %229 = sbr.rel (%p227) target = $region20
        $region19: #{tpu_custom_call.1} parent=11 // pred_region
          _
        $region20: #{tpu_custom_call.1} parent=11 // pred_fallthru
          _
        // Predicated region
        $region21: #{tpu_custom_call.1} parent=11 // pred_check
          %p230 = pneg %p107
        $region22: #{tpu_custom_call.1} parent=11 // pred_check_branch
          %232 = sbr.rel (%p230) target = $region24
        $region23: #{tpu_custom_call.1} parent=11 // pred_region
          _
        $region24: #{tpu_custom_call.1} parent=11 // pred_fallthru
          _
        // Predicated region
        $region25: #{tpu_custom_call.1} parent=11 // pred_check
          %p233 = pneg %p128
        $region26: #{tpu_custom_call.1} parent=11 // pred_check_branch
          %235 = sbr.rel (%p233) target = $region28
        $region27: #{tpu_custom_call.1} parent=11 // pred_region
          _
        $region28: #{tpu_custom_call.1} parent=11 // pred_fallthru
          _
        // Predicated region
        $region29: #{tpu_custom_call.1} parent=11 // pred_check
          %p236 = pneg %p149
        $region30: #{tpu_custom_call.1} parent=11 // pred_check_branch
          %238 = sbr.rel (%p236) target = $region32
        $region31: #{tpu_custom_call.1} parent=11 // pred_region
          _
        $region32: #{tpu_custom_call.1} parent=11 // pred_fallthru
          _
      $region12: #{tpu_custom_call.1} parent=5 // pred_fallthru
        _
      %p239 = scmp.lt.s32.totalorder %s18, 2
      // Predicated region
      $region33: #{tpu_custom_call.1} parent=5 // pred_check
        %p240 = pneg %p239
      $region34: #{tpu_custom_call.1} parent=5 // pred_check_branch
        %242 = sbr.rel (%p240) target = $region36
      $region35: #{tpu_custom_call.1} parent=5 // pred_region
        // Predicated region
        $region37: #{tpu_custom_call.1} parent=35 // pred_check
          %p243 = pneg %p59
        $region38: #{tpu_custom_call.1} parent=35 // pred_check_branch
          %245 = sbr.rel (%p243) target = $region40
        $region39: #{tpu_custom_call.1} parent=35 // pred_region
          %s246 = smul.u32 8, %s18
          %p247 = scmp.lt.s32.totalorder %s246, 15
          %s248 = scalar_select %p247, %s246, 15
          %s249 = smul.addr %s248, 8
          %s250 = scalar_lea.vmem %s1, %s249
          %s251 = smul.u32 8, %s18
        $region40: #{tpu_custom_call.1} parent=35 // pred_fallthru
          _
      $region36: #{tpu_custom_call.1} parent=5 // pred_fallthru
        _
      %p252 = scmp.le.s32.totalorder 1, %s18
      %p253 = scmp.lt.s32.totalorder %s18, 3
      %p254 = pnand %p252, %p253
      %p255 = pneg %p254
      // Predicated region
      $region41: #{tpu_custom_call.1} parent=5 // pred_check
        _
      $region42: #{tpu_custom_call.1} parent=5 // pred_check_branch
        %257 = sbr.rel (%p254) target = $region44
      $region43: #{tpu_custom_call.1} parent=5 // pred_region
        %s258 = ssub.s32 %s18, 1
        // Predicated region
        $region45: #{tpu_custom_call.1} parent=43 // pred_check
          %p259 = pneg %p39
        $region46: #{tpu_custom_call.1} parent=43 // pred_check_branch
          %261 = sbr.rel (%p259) target = $region48
        $region47: #{tpu_custom_call.1} parent=43 // pred_region
          %262 = dma.done [#allocation4], 16
        $region48: #{tpu_custom_call.1} parent=43 // pred_fallthru
          _
        %263 = sfence
        %p264 = pneg %p39
        %p265 = pneg %p36
        %s266 = smul.u32 8, %s23
        %p267 = scmp.lt.s32.totalorder %s266, 15
        %s268 = scalar_select %p267, %s266, 15
        %s269 = smul.addr %s268, 8
        %s270 = scalar_lea.vmem %s1, %s269
        %p271 = pneg %p65
        %p272 = pneg %p62
        %p273 = pneg %p86
        %p274 = pneg %p83
        %p275 = pneg %p107
        %p276 = pneg %p104
        %p277 = pneg %p128
        %p278 = pneg %p125
        %p279 = pneg %p149
        %p280 = pneg %p146
        %p281 = pneg %p175
        %p282 = pneg %p172
        %s283 = sand.u32 %s162, 1
        %s284 = scalar_lea.sflag [#allocation3], %s283
        %s285 = sand.u32 %s162, 1
        %s286 = smul.addr %s285, 64
        %s287 = scalar_lea.vmem [#allocation5], %s286
        %p288 = pneg %p201
        %p289 = pneg %p198
        %s290 = smul.u32 8, %s23
        %p291 = scmp.lt.s32.totalorder %s290, 15
        %s292 = scalar_select %p291, %s290, 15
        %s293 = smul.addr %s292, 8
        %s294 = scalar_lea.vmem %s7, %s293
        %s295 = smul.u32 8, %s23
        %p296 = scmp.lt.s32.totalorder %s295, 15
        %s297 = scalar_select %p296, %s295, 15
        %s298 = smul.addr %s297, 8
        %s299 = scalar_lea.vmem %s1, %s298
        %s300 = smul.u32 8, %s23
        %s301 = smul.u32 8, %s23
        %s302 = smul.u32 8, %s23
        %p303 = scmp.lt.s32.totalorder %s302, 15
        %s304 = scalar_select %p303, %s302, 15
        %s305 = smul.addr %s304, 8
        %s306 = scalar_lea.vmem %s7, %s305
        %s307 = smul.u32 8, %s23
        %s308 = sld [smem:[#allocation2]]
        %s309 = sld [smem:[#allocation2 + $0x1]]
        %v310 = vld [vmem:[%s299] sm:$0xff]
        %v311 = vld [vmem:[%s299 + $0x8] sm:$0xff]
        %v312 = vld [vmem:[%s299 + $0x10] sm:$0xff]
        %v313 = vld [vmem:[%s299 + $0x18] sm:$0xff]
        %v314 = vld [vmem:[%s299 + $0x20] sm:$0xff]
        %v315 = vld [vmem:[%s299 + $0x28] sm:$0xff]
        %v316 = vld [vmem:[%s299 + $0x30] sm:$0xff]
        %v317 = vld [vmem:[%s299 + $0x38] sm:$0xff]
        %v318 = vld [vmem:[%s2] sm:$0x1]
        %v319 = vld [vmem:[%s3] sm:$0x1]
        %v321 = vlaneseq
        %v322 = vshrl.u32 %v321, 7
        %v323 = vsub.s32 0, %v322
        %v324 = vrot.slane %v318, %v323
        %v326 = vmul.f32 %v310, %v324
        %v327 = vmul.f32 %v311, %v324
        %v328 = vmul.f32 %v312, %v324
        %v329 = vmul.f32 %v313, %v324
        %v330 = vmul.f32 %v314, %v324
        %v331 = vmul.f32 %v315, %v324
        %v332 = vmul.f32 %v316, %v324
        %v333 = vmul.f32 %v317, %v324
        %v334 = vld [vmem:[%s4] sm:$0xff]
        %v335 = vld [vmem:[%s4 + $0x8] sm:$0xff]
        %v336 = vld [vmem:[%s4 + $0x10] sm:$0xff]
        %v337 = vld [vmem:[%s4 + $0x18] sm:$0xff]
        %v338 = vld [vmem:[%s4 + $0x20] sm:$0xff]
        %v339 = vld [vmem:[%s4 + $0x28] sm:$0xff]
        %v340 = vld [vmem:[%s4 + $0x30] sm:$0xff]
        %v341 = vld [vmem:[%s4 + $0x38] sm:$0xff]
        %v342 = vld [vmem:[%s4 + $0x40] sm:$0xff]
        %v343 = vld [vmem:[%s4 + $0x48] sm:$0xff]
        %v344 = vld [vmem:[%s4 + $0x50] sm:$0xff]
        %v345 = vld [vmem:[%s4 + $0x58] sm:$0xff]
        %v346 = vld [vmem:[%s4 + $0x60] sm:$0xff]
        %v347 = vld [vmem:[%s4 + $0x68] sm:$0xff]
        %v348 = vld [vmem:[%s4 + $0x70] sm:$0xff]
        %v349 = vld [vmem:[%s4 + $0x78] sm:$0xff]
        %v350 = vstv %s308
        %351 = vmatprep.subr.mxu0 0.0
        %v352 = vand.u32 %v334, 4294901760
        %353 = vmatpush1.msra.mxu0 %v352
        %354 = vmatprep.subr.mxu0 0.0
        %v355 = vand.u32 %v335, 4294901760
        %356 = vmatpush1.msra.mxu0 %v355
        %357 = vmatprep.subr.mxu0 0.0
        %v358 = vand.u32 %v336, 4294901760
        %359 = vmatpush1.msra.mxu0 %v358
        %360 = vmatprep.subr.mxu0 0.0
        %v361 = vand.u32 %v337, 4294901760
        %362 = vmatpush1.msra.mxu0 %v361
        %363 = vmatprep.subr.mxu0 0.0
        %v364 = vand.u32 %v338, 4294901760
        %365 = vmatpush1.msra.mxu0 %v364
        %366 = vmatprep.subr.mxu0 0.0
        %v367 = vand.u32 %v339, 4294901760
        %368 = vmatpush1.msra.mxu0 %v367
        %369 = vmatprep.subr.mxu0 0.0
        %v370 = vand.u32 %v340, 4294901760
        %371 = vmatpush1.msra.mxu0 %v370
        %372 = vmatprep.subr.mxu0 0.0
        %v373 = vand.u32 %v341, 4294901760
        %374 = vmatpush1.msra.mxu0 %v373
        %375 = vmatprep.subr.mxu0 0.0
        %v376 = vand.u32 %v342, 4294901760
        %377 = vmatpush1.msra.mxu0 %v376
        %378 = vmatprep.subr.mxu0 0.0
        %v379 = vand.u32 %v343, 4294901760
        %380 = vmatpush1.msra.mxu0 %v379
        %381 = vmatprep.subr.mxu0 0.0
        %v382 = vand.u32 %v344, 4294901760
        %383 = vmatpush1.msra.mxu0 %v382
        %384 = vmatprep.subr.mxu0 0.0
        %v385 = vand.u32 %v345, 4294901760
        %386 = vmatpush1.msra.mxu0 %v385
        %387 = vmatprep.subr.mxu0 0.0
        %v388 = vand.u32 %v346, 4294901760
        %389 = vmatpush1.msra.mxu0 %v388
        %390 = vmatprep.subr.mxu0 0.0
        %v391 = vand.u32 %v347, 4294901760
        %392 = vmatpush1.msra.mxu0 %v391
        %393 = vmatprep.subr.mxu0 0.0
        %v394 = vand.u32 %v348, 4294901760
        %395 = vmatpush1.msra.mxu0 %v394
        %396 = vmatprep.subr.mxu0 0.0
        %v397 = vand.u32 %v349, 4294901760
        %398 = vmatpush1.msra.mxu0 %v397
        %399 = vmatprep.subr.mxu0 0.0
        %400 = vmatpush1.msra.mxu0 0.0
        %401 = vmatprep.subr.mxu0 0.0
        %402 = vmatpush1.msra.mxu0 0.0
        %403 = vmatprep.subr.mxu0 0.0
        %404 = vmatpush1.msra.mxu0 0.0
        %405 = vmatprep.subr.mxu0 0.0
        %406 = vmatpush1.msra.mxu0 0.0
        %407 = vmatprep.subr.mxu0 0.0
        %408 = vmatpush1.msra.mxu0 0.0
        %409 = vmatprep.subr.mxu0 0.0
        %410 = vmatpush1.msra.mxu0 0.0
        %411 = vmatprep.subr.mxu0 0.0
        %412 = vmatpush1.msra.mxu0 0.0
        %413 = vmatprep.subr.mxu0 0.0
        %414 = vmatpush1.msra.mxu0 0.0
        %415 = vmatprep.subr.mxu0 0.0
        %416 = vmatpush1.msra.mxu0 0.0
        %417 = vmatprep.subr.mxu0 0.0
        %418 = vmatpush1.msra.mxu0 0.0
        %419 = vmatprep.subr.mxu0 0.0
        %420 = vmatpush1.msra.mxu0 0.0
        %421 = vmatprep.subr.mxu0 0.0
        %422 = vmatpush1.msra.mxu0 0.0
        %423 = vmatprep.subr.mxu0 0.0
        %424 = vmatpush1.msra.mxu0 0.0
        %425 = vmatprep.subr.mxu0 0.0
        %426 = vmatpush1.msra.mxu0 0.0
        %427 = vmatprep.subr.mxu0 0.0
        %428 = vmatpush1.msra.mxu0 0.0
        %429 = vmatprep.subr.mxu0 0.0
        %430 = vmatpush1.msra.mxu0 0.0
        %431 = vmatprep.mubr.f32.mxu0 0.0
        %v432 = vand.u32 %v326, 4294901760
        %v433 = vsub.f32 %v326, %v432
        %v434 = vand.u32 %v433, 4294901760
        %v435 = vsub.f32 %v433, %v434
        %v436 = vand.u32 %v435, 4294901760
        %437 = vmatmul.mubr.f32.gmra.mrb[0].mxu0 %v436
        %v438 = vpop.f32.mrb[0].mxu0
        %v439 = vadd.f32 %v350, %v438
        %v440 = vpop.f32.mrb[0].mxu0
        %441 = vmatprep.mubr.f32.mxu0 0.0
        %v442 = vand.u32 %v327, 4294901760
        %v443 = vsub.f32 %v327, %v442
        %v444 = vand.u32 %v443, 4294901760
        %v445 = vsub.f32 %v443, %v444
        %v446 = vand.u32 %v445, 4294901760
        %447 = vmatmul.mubr.f32.gmra.mrb[0].mxu0 %v446
        %v448 = vpop.f32.mrb[0].mxu0
        %v449 = vadd.f32 %v350, %v448
        %v450 = vpop.f32.mrb[0].mxu0
        %451 = vmatprep.mubr.f32.mxu0 0.0
        %v452 = vand.u32 %v328, 4294901760
        %v453 = vsub.f32 %v328, %v452
        %v454 = vand.u32 %v453, 4294901760
        %v455 = vsub.f32 %v453, %v454
        %v456 = vand.u32 %v455, 4294901760
        %457 = vmatmul.mubr.f32.gmra.mrb[0].mxu0 %v456
        %v458 = vpop.f32.mrb[0].mxu0
        %v459 = vadd.f32 %v350, %v458
        %v460 = vpop.f32.mrb[0].mxu0
        %461 = vmatprep.mubr.f32.mxu0 0.0
        %v462 = vand.u32 %v329, 4294901760
        %v463 = vsub.f32 %v329, %v462
        %v464 = vand.u32 %v463, 4294901760
        %v465 = vsub.f32 %v463, %v464
        %v466 = vand.u32 %v465, 4294901760
        %467 = vmatmul.mubr.f32.gmra.mrb[0].mxu0 %v466
        %v468 = vpop.f32.mrb[0].mxu0
        %v469 = vadd.f32 %v350, %v468
        %v470 = vpop.f32.mrb[0].mxu0
        %471 = vmatprep.mubr.f32.mxu0 0.0
        %v472 = vand.u32 %v330, 4294901760
        %v473 = vsub.f32 %v330, %v472
        %v474 = vand.u32 %v473, 4294901760
        %v475 = vsub.f32 %v473, %v474
        %v476 = vand.u32 %v475, 4294901760
        %477 = vmatmul.mubr.f32.gmra.mrb[0].mxu0 %v476
        %v478 = vpop.f32.mrb[0].mxu0
        %v479 = vadd.f32 %v350, %v478
        %v480 = vpop.f32.mrb[0].mxu0
        %481 = vmatprep.mubr.f32.mxu0 0.0
        %v482 = vand.u32 %v331, 4294901760
        %v483 = vsub.f32 %v331, %v482
        %v484 = vand.u32 %v483, 4294901760
        %v485 = vsub.f32 %v483, %v484
        %v486 = vand.u32 %v485, 4294901760
        %487 = vmatmul.mubr.f32.gmra.mrb[0].mxu0 %v486
        %v488 = vpop.f32.mrb[0].mxu0
        %v489 = vadd.f32 %v350, %v488
        %v490 = vpop.f32.mrb[0].mxu0
        %491 = vmatprep.mubr.f32.mxu0 0.0
        %v492 = vand.u32 %v332, 4294901760
        %v493 = vsub.f32 %v332, %v492
        %v494 = vand.u32 %v493, 4294901760
        %v495 = vsub.f32 %v493, %v494
        %v496 = vand.u32 %v495, 4294901760
        %497 = vmatmul.mubr.f32.gmra.mrb[0].mxu0 %v496
        %v498 = vpop.f32.mrb[0].mxu0
        %v499 = vadd.f32 %v350, %v498
        %v500 = vpop.f32.mrb[0].mxu0
        %501 = vmatprep.mubr.f32.mxu0 0.0
        %v502 = vand.u32 %v333, 4294901760
        %v503 = vsub.f32 %v333, %v502
        %v504 = vand.u32 %v503, 4294901760
        %v505 = vsub.f32 %v503, %v504
        %v506 = vand.u32 %v505, 4294901760
        %507 = vmatmul.mubr.f32.gmra.mrb[0].mxu0 %v506
        %v508 = vpop.f32.mrb[0].mxu0
        %v509 = vadd.f32 %v350, %v508
        %v510 = vpop.f32.mrb[0].mxu0
        %511 = vdwg.mxu0
        %512 = vmatprep.subr.mxu0 0.0
        %v513 = vand.u32 %v334, 4294901760
        %v514 = vsub.f32 %v334, %v513
        %v515 = vand.u32 %v514, 4294901760
        %v516 = vsub.f32 %v514, %v515
        %v517 = vand.u32 %v516, 4294901760
        %518 = vmatpush1.msra.mxu0 %v517
        %519 = vmatprep.subr.mxu0 0.0
        %v520 = vand.u32 %v335, 4294901760
        %v521 = vsub.f32 %v335, %v520
        %v522 = vand.u32 %v521, 4294901760
        %v523 = vsub.f32 %v521, %v522
        %v524 = vand.u32 %v523, 4294901760
        %525 = vmatpush1.msra.mxu0 %v524
        %526 = vmatprep.subr.mxu0 0.0
        %v527 = vand.u32 %v336, 4294901760
        %v528 = vsub.f32 %v336, %v527
        %v529 = vand.u32 %v528, 4294901760
        %v530 = vsub.f32 %v528, %v529
        %v531 = vand.u32 %v530, 4294901760
        %532 = vmatpush1.msra.mxu0 %v531
        %533 = vmatprep.subr.mxu0 0.0
        %v534 = vand.u32 %v337, 4294901760
        %v535 = vsub.f32 %v337, %v534
        %v536 = vand.u32 %v535, 4294901760
        %v537 = vsub.f32 %v535, %v536
        %v538 = vand.u32 %v537, 4294901760
        %539 = vmatpush1.msra.mxu0 %v538
        %540 = vmatprep.subr.mxu0 0.0
        %v541 = vand.u32 %v338, 4294901760
        %v542 = vsub.f32 %v338, %v541
        %v543 = vand.u32 %v542, 4294901760
        %v544 = vsub.f32 %v542, %v543
        %v545 = vand.u32 %v544, 4294901760
        %546 = vmatpush1.msra.mxu0 %v545
        %547 = vmatprep.subr.mxu0 0.0
        %v548 = vand.u32 %v339, 4294901760
        %v549 = vsub.f32 %v339, %v548
        %v550 = vand.u32 %v549, 4294901760
        %v551 = vsub.f32 %v549, %v550
        %v552 = vand.u32 %v551, 4294901760
        %553 = vmatpush1.msra.mxu0 %v552
        %554 = vmatprep.subr.mxu0 0.0
        %v555 = vand.u32 %v340, 4294901760
        %v556 = vsub.f32 %v340, %v555
        %v557 = vand.u32 %v556, 4294901760
        %v558 = vsub.f32 %v556, %v557
        %v559 = vand.u32 %v558, 4294901760
        %560 = vmatpush1.msra.mxu0 %v559
        %561 = vmatprep.subr.mxu0 0.0
        %v562 = vand.u32 %v341, 4294901760
        %v563 = vsub.f32 %v341, %v562
        %v564 = vand.u32 %v563, 4294901760
        %v565 = vsub.f32 %v563, %v564
        %v566 = vand.u32 %v565, 4294901760
        %567 = vmatpush1.msra.mxu0 %v566
        %568 = vmatprep.subr.mxu0 0.0
        %v569 = vand.u32 %v342, 4294901760
        %v570 = vsub.f32 %v342, %v569
        %v571 = vand.u32 %v570, 4294901760
        %v572 = vsub.f32 %v570, %v571
        %v573 = vand.u32 %v572, 4294901760
        %574 = vmatpush1.msra.mxu0 %v573
        %575 = vmatprep.subr.mxu0 0.0
        %v576 = vand.u32 %v343, 4294901760
        %v577 = vsub.f32 %v343, %v576
        %v578 = vand.u32 %v577, 4294901760
        %v579 = vsub.f32 %v577, %v578
        %v580 = vand.u32 %v579, 4294901760
        %581 = vmatpush1.msra.mxu0 %v580
        %582 = vmatprep.subr.mxu0 0.0
        %v583 = vand.u32 %v344, 4294901760
        %v584 = vsub.f32 %v344, %v583
        %v585 = vand.u32 %v584, 4294901760
        %v586 = vsub.f32 %v584, %v585
        %v587 = vand.u32 %v586, 4294901760
        %588 = vmatpush1.msra.mxu0 %v587
        %589 = vmatprep.subr.mxu0 0.0
        %v590 = vand.u32 %v345, 4294901760
        %v591 = vsub.f32 %v345, %v590
        %v592 = vand.u32 %v591, 4294901760
        %v593 = vsub.f32 %v591, %v592
        %v594 = vand.u32 %v593, 4294901760
        %595 = vmatpush1.msra.mxu0 %v594
        %596 = vmatprep.subr.mxu0 0.0
        %v597 = vand.u32 %v346, 4294901760
        %v598 = vsub.f32 %v346, %v597
        %v599 = vand.u32 %v598, 4294901760
        %v600 = vsub.f32 %v598, %v599
        %v601 = vand.u32 %v600, 4294901760
        %602 = vmatpush1.msra.mxu0 %v601
        %603 = vmatprep.subr.mxu0 0.0
        %v604 = vand.u32 %v347, 4294901760
        %v605 = vsub.f32 %v347, %v604
        %v606 = vand.u32 %v605, 4294901760
        %v607 = vsub.f32 %v605, %v606
        %v608 = vand.u32 %v607, 4294901760
        %609 = vmatpush1.msra.mxu0 %v608
        %610 = vmatprep.subr.mxu0 0.0
        %v611 = vand.u32 %v348, 4294901760
        %v612 = vsub.f32 %v348, %v611
        %v613 = vand.u32 %v612, 4294901760
        %v614 = vsub.f32 %v612, %v613
        %v615 = vand.u32 %v614, 4294901760
        %616 = vmatpush1.msra.mxu0 %v615
        %617 = vmatprep.subr.mxu0 0.0
        %v618 = vand.u32 %v349, 4294901760
        %v619 = vsub.f32 %v349, %v618
        %v620 = vand.u32 %v619, 4294901760
        %v621 = vsub.f32 %v619, %v620
        %v622 = vand.u32 %v621, 4294901760
        %623 = vmatpush1.msra.mxu0 %v622
        %624 = vmatprep.subr.mxu0 0.0
        %625 = vmatpush1.msra.mxu0 0.0
        %626 = vmatprep.subr.mxu0 0.0
        %627 = vmatpush1.msra.mxu0 0.0
        %628 = vmatprep.subr.mxu0 0.0
        %629 = vmatpush1.msra.mxu0 0.0
        %630 = vmatprep.subr.mxu0 0.0
        %631 = vmatpush1.msra.mxu0 0.0
        %632 = vmatprep.subr.mxu0 0.0
        %633 = vmatpush1.msra.mxu0 0.0
        %634 = vmatprep.subr.mxu0 0.0
        %635 = vmatpush1.msra.mxu0 0.0
        %636 = vmatprep.subr.mxu0 0.0
        %637 = vmatpush1.msra.mxu0 0.0
        %638 = vmatprep.subr.mxu0 0.0
        %639 = vmatpush1.msra.mxu0 0.0
        %640 = vmatprep.subr.mxu0 0.0
        %641 = vmatpush1.msra.mxu0 0.0
        %642 = vmatprep.subr.mxu0 0.0
        %643 = vmatpush1.msra.mxu0 0.0
        %644 = vmatprep.subr.mxu0 0.0
        %645 = vmatpush1.msra.mxu0 0.0
        %646 = vmatprep.subr.mxu0 0.0
        %647 = vmatpush1.msra.mxu0 0.0
        %648 = vmatprep.subr.mxu0 0.0
        %649 = vmatpush1.msra.mxu0 0.0
        %650 = vmatprep.subr.mxu0 0.0
        %651 = vmatpush1.msra.mxu0 0.0
        %652 = vmatprep.subr.mxu0 0.0
        %653 = vmatpush1.msra.mxu0 0.0
        %654 = vmatprep.subr.mxu0 0.0
        %655 = vmatpush1.msra.mxu0 0.0
        %656 = vmatprep.mubr.f32.mxu0 0.0
        %v657 = vand.u32 %v326, 4294901760
        %658 = vmatmul.mubr.f32.gmra.mrb[0].mxu0 %v657
        %v659 = vpop.f32.mrb[0].mxu0
        %v660 = vadd.f32 %v439, %v659
        %v661 = vpop.f32.mrb[0].mxu0
        %662 = vmatprep.mubr.f32.mxu0 0.0
        %v663 = vand.u32 %v327, 4294901760
        %664 = vmatmul.mubr.f32.gmra.mrb[0].mxu0 %v663
        %v665 = vpop.f32.mrb[0].mxu0
        %v666 = vadd.f32 %v449, %v665
        %v667 = vpop.f32.mrb[0].mxu0
        %668 = vmatprep.mubr.f32.mxu0 0.0
        %v669 = vand.u32 %v328, 4294901760
        %670 = vmatmul.mubr.f32.gmra.mrb[0].mxu0 %v669
        %v671 = vpop.f32.mrb[0].mxu0
        %v672 = vadd.f32 %v459, %v671
        %v673 = vpop.f32.mrb[0].mxu0
        %674 = vmatprep.mubr.f32.mxu0 0.0
        %v675 = vand.u32 %v329, 4294901760
        %676 = vmatmul.mubr.f32.gmra.mrb[0].mxu0 %v675
        %v677 = vpop.f32.mrb[0].mxu0
        %v678 = vadd.f32 %v469, %v677
        %v679 = vpop.f32.mrb[0].mxu0
        %680 = vmatprep.mubr.f32.mxu0 0.0
        %v681 = vand.u32 %v330, 4294901760
        %682 = vmatmul.mubr.f32.gmra.mrb[0].mxu0 %v681
        %v683 = vpop.f32.mrb[0].mxu0
        %v684 = vadd.f32 %v479, %v683
        %v685 = vpop.f32.mrb[0].mxu0
        %686 = vmatprep.mubr.f32.mxu0 0.0
        %v687 = vand.u32 %v331, 4294901760
        %688 = vmatmul.mubr.f32.gmra.mrb[0].mxu0 %v687
        %v689 = vpop.f32.mrb[0].mxu0
        %v690 = vadd.f32 %v489, %v689
        %v691 = vpop.f32.mrb[0].mxu0
        %692 = vmatprep.mubr.f32.mxu0 0.0
        %v693 = vand.u32 %v332, 4294901760
        %694 = vmatmul.mubr.f32.gmra.mrb[0].mxu0 %v693
        %v695 = vpop.f32.mrb[0].mxu0
        %v696 = vadd.f32 %v499, %v695
        %v697 = vpop.f32.mrb[0].mxu0
        %698 = vmatprep.mubr.f32.mxu0 0.0
        %v699 = vand.u32 %v333, 4294901760
        %700 = vmatmul.mubr.f32.gmra.mrb[0].mxu0 %v699
        %v701 = vpop.f32.mrb[0].mxu0
        %v702 = vadd.f32 %v509, %v701
        %v703 = vpop.f32.mrb[0].mxu0
        %704 = vdwg.mxu0
        %705 = vmatprep.subr.mxu0 0.0
        %v706 = vand.u32 %v334, 4294901760
        %v707 = vsub.f32 %v334, %v706
        %708 = vmatpush1.msra.mxu0 %v707
        %709 = vmatprep.subr.mxu0 0.0
        %v710 = vand.u32 %v335, 4294901760
        %v711 = vsub.f32 %v335, %v710
        %712 = vmatpush1.msra.mxu0 %v711
        %713 = vmatprep.subr.mxu0 0.0
        %v714 = vand.u32 %v336, 4294901760
        %v715 = vsub.f32 %v336, %v714
        %716 = vmatpush1.msra.mxu0 %v715
        %717 = vmatprep.subr.mxu0 0.0
        %v718 = vand.u32 %v337, 4294901760
        %v719 = vsub.f32 %v337, %v718
        %720 = vmatpush1.msra.mxu0 %v719
        %721 = vmatprep.subr.mxu0 0.0
        %v722 = vand.u32 %v338, 4294901760
        %v723 = vsub.f32 %v338, %v722
        %724 = vmatpush1.msra.mxu0 %v723
        %725 = vmatprep.subr.mxu0 0.0
        %v726 = vand.u32 %v339, 4294901760
        %v727 = vsub.f32 %v339, %v726
        %728 = vmatpush1.msra.mxu0 %v727
        %729 = vmatprep.subr.mxu0 0.0
        %v730 = vand.u32 %v340, 4294901760
        %v731 = vsub.f32 %v340, %v730
        %732 = vmatpush1.msra.mxu0 %v731
        %733 = vmatprep.subr.mxu0 0.0
        %v734 = vand.u32 %v341, 4294901760
        %v735 = vsub.f32 %v341, %v734
        %736 = vmatpush1.msra.mxu0 %v735
        %737 = vmatprep.subr.mxu0 0.0
        %v738 = vand.u32 %v342, 4294901760
        %v739 = vsub.f32 %v342, %v738
        %740 = vmatpush1.msra.mxu0 %v739
        %741 = vmatprep.subr.mxu0 0.0
        %v742 = vand.u32 %v343, 4294901760
        %v743 = vsub.f32 %v343, %v742
        %744 = vmatpush1.msra.mxu0 %v743
        %745 = vmatprep.subr.mxu0 0.0
        %v746 = vand.u32 %v344, 4294901760
        %v747 = vsub.f32 %v344, %v746
        %748 = vmatpush1.msra.mxu0 %v747
        %749 = vmatprep.subr.mxu0 0.0
        %v750 = vand.u32 %v345, 4294901760
        %v751 = vsub.f32 %v345, %v750
        %752 = vmatpush1.msra.mxu0 %v751
        %753 = vmatprep.subr.mxu0 0.0
        %v754 = vand.u32 %v346, 4294901760
        %v755 = vsub.f32 %v346, %v754
        %756 = vmatpush1.msra.mxu0 %v755
        %757 = vmatprep.subr.mxu0 0.0
        %v758 = vand.u32 %v347, 4294901760
        %v759 = vsub.f32 %v347, %v758
        %760 = vmatpush1.msra.mxu0 %v759
        %761 = vmatprep.subr.mxu0 0.0
        %v762 = vand.u32 %v348, 4294901760
        %v763 = vsub.f32 %v348, %v762
        %764 = vmatpush1.msra.mxu0 %v763
        %765 = vmatprep.subr.mxu0 0.0
        %v766 = vand.u32 %v349, 4294901760
        %v767 = vsub.f32 %v349, %v766
        %768 = vmatpush1.msra.mxu0 %v767
        %769 = vmatprep.subr.mxu0 0.0
        %770 = vmatpush1.msra.mxu0 0.0
        %771 = vmatprep.subr.mxu0 0.0
        %772 = vmatpush1.msra.mxu0 0.0
        %773 = vmatprep.subr.mxu0 0.0
        %774 = vmatpush1.msra.mxu0 0.0
        %775 = vmatprep.subr.mxu0 0.0
        %776 = vmatpush1.msra.mxu0 0.0
        %777 = vmatprep.subr.mxu0 0.0
        %778 = vmatpush1.msra.mxu0 0.0
        %779 = vmatprep.subr.mxu0 0.0
        %780 = vmatpush1.msra.mxu0 0.0
        %781 = vmatprep.subr.mxu0 0.0
        %782 = vmatpush1.msra.mxu0 0.0
        %783 = vmatprep.subr.mxu0 0.0
        %784 = vmatpush1.msra.mxu0 0.0
        %785 = vmatprep.subr.mxu0 0.0
        %786 = vmatpush1.msra.mxu0 0.0
        %787 = vmatprep.subr.mxu0 0.0
        %788 = vmatpush1.msra.mxu0 0.0
        %789 = vmatprep.subr.mxu0 0.0
        %790 = vmatpush1.msra.mxu0 0.0
        %791 = vmatprep.subr.mxu0 0.0
        %792 = vmatpush1.msra.mxu0 0.0
        %793 = vmatprep.subr.mxu0 0.0
        %794 = vmatpush1.msra.mxu0 0.0
        %795 = vmatprep.subr.mxu0 0.0
        %796 = vmatpush1.msra.mxu0 0.0
        %797 = vmatprep.subr.mxu0 0.0
        %798 = vmatpush1.msra.mxu0 0.0
        %799 = vmatprep.subr.mxu0 0.0
        %800 = vmatpush1.msra.mxu0 0.0
        %801 = vmatprep.mubr.f32.mxu0 0.0
        %v802 = vand.u32 %v326, 4294901760
        %v803 = vsub.f32 %v326, %v802
        %804 = vmatmul.mubr.f32.gmra.mrb[0].mxu0 %v803
        %v805 = vpop.f32.mrb[0].mxu0
        %v806 = vadd.f32 %v660, %v805
        %v807 = vpop.f32.mrb[0].mxu0
        %808 = vmatprep.mubr.f32.mxu0 0.0
        %v809 = vand.u32 %v327, 4294901760
        %v810 = vsub.f32 %v327, %v809
        %811 = vmatmul.mubr.f32.gmra.mrb[0].mxu0 %v810
        %v812 = vpop.f32.mrb[0].mxu0
        %v813 = vadd.f32 %v666, %v812
        %v814 = vpop.f32.mrb[0].mxu0
        %815 = vmatprep.mubr.f32.mxu0 0.0
        %v816 = vand.u32 %v328, 4294901760
        %v817 = vsub.f32 %v328, %v816
        %818 = vmatmul.mubr.f32.gmra.mrb[0].mxu0 %v817
        %v819 = vpop.f32.mrb[0].mxu0
        %v820 = vadd.f32 %v672, %v819
        %v821 = vpop.f32.mrb[0].mxu0
        %822 = vmatprep.mubr.f32.mxu0 0.0
        %v823 = vand.u32 %v329, 4294901760
        %v824 = vsub.f32 %v329, %v823
        %825 = vmatmul.mubr.f32.gmra.mrb[0].mxu0 %v824
        %v826 = vpop.f32.mrb[0].mxu0
        %v827 = vadd.f32 %v678, %v826
        %v828 = vpop.f32.mrb[0].mxu0
        %829 = vmatprep.mubr.f32.mxu0 0.0
        %v830 = vand.u32 %v330, 4294901760
        %v831 = vsub.f32 %v330, %v830
        %832 = vmatmul.mubr.f32.gmra.mrb[0].mxu0 %v831
        %v833 = vpop.f32.mrb[0].mxu0
        %v834 = vadd.f32 %v684, %v833
        %v835 = vpop.f32.mrb[0].mxu0
        %836 = vmatprep.mubr.f32.mxu0 0.0
        %v837 = vand.u32 %v331, 4294901760
        %v838 = vsub.f32 %v331, %v837
        %839 = vmatmul.mubr.f32.gmra.mrb[0].mxu0 %v838
        %v840 = vpop.f32.mrb[0].mxu0
        %v841 = vadd.f32 %v690, %v840
        %v842 = vpop.f32.mrb[0].mxu0
        %843 = vmatprep.mubr.f32.mxu0 0.0
        %v844 = vand.u32 %v332, 4294901760
        %v845 = vsub.f32 %v332, %v844
        %846 = vmatmul.mubr.f32.gmra.mrb[0].mxu0 %v845
        %v847 = vpop.f32.mrb[0].mxu0
        %v848 = vadd.f32 %v696, %v847
        %v849 = vpop.f32.mrb[0].mxu0
        %850 = vmatprep.mubr.f32.mxu0 0.0
        %v851 = vand.u32 %v333, 4294901760
        %v852 = vsub.f32 %v333, %v851
        %853 = vmatmul.mubr.f32.gmra.mrb[0].mxu0 %v852
        %v854 = vpop.f32.mrb[0].mxu0
        %v855 = vadd.f32 %v702, %v854
        %v856 = vpop.f32.mrb[0].mxu0
        %857 = vdwg.mxu0
        %858 = vmatprep.subr.mxu0 0.0
        %v859 = vand.u32 %v334, 4294901760
        %860 = vmatpush1.msra.mxu0 %v859
        %861 = vmatprep.subr.mxu0 0.0
        %v862 = vand.u32 %v335, 4294901760
        %863 = vmatpush1.msra.mxu0 %v862
        %864 = vmatprep.subr.mxu0 0.0
        %v865 = vand.u32 %v336, 4294901760
        %866 = vmatpush1.msra.mxu0 %v865
        %867 = vmatprep.subr.mxu0 0.0
        %v868 = vand.u32 %v337, 4294901760
        %869 = vmatpush1.msra.mxu0 %v868
        %870 = vmatprep.subr.mxu0 0.0
        %v871 = vand.u32 %v338, 4294901760
        %872 = vmatpush1.msra.mxu0 %v871
        %873 = vmatprep.subr.mxu0 0.0
        %v874 = vand.u32 %v339, 4294901760
        %875 = vmatpush1.msra.mxu0 %v874
        %876 = vmatprep.subr.mxu0 0.0
        %v877 = vand.u32 %v340, 4294901760
        %878 = vmatpush1.msra.mxu0 %v877
        %879 = vmatprep.subr.mxu0 0.0
        %v880 = vand.u32 %v341, 4294901760
        %881 = vmatpush1.msra.mxu0 %v880
        %882 = vmatprep.subr.mxu0 0.0
        %v883 = vand.u32 %v342, 4294901760
        %884 = vmatpush1.msra.mxu0 %v883
        %885 = vmatprep.subr.mxu0 0.0
        %v886 = vand.u32 %v343, 4294901760
        %887 = vmatpush1.msra.mxu0 %v886
        %888 = vmatprep.subr.mxu0 0.0
        %v889 = vand.u32 %v344, 4294901760
        %890 = vmatpush1.msra.mxu0 %v889
        %891 = vmatprep.subr.mxu0 0.0
        %v892 = vand.u32 %v345, 4294901760
        %893 = vmatpush1.msra.mxu0 %v892
        %894 = vmatprep.subr.mxu0 0.0
        %v895 = vand.u32 %v346, 4294901760
        %896 = vmatpush1.msra.mxu0 %v895
        %897 = vmatprep.subr.mxu0 0.0
        %v898 = vand.u32 %v347, 4294901760
        %899 = vmatpush1.msra.mxu0 %v898
        %900 = vmatprep.subr.mxu0 0.0
        %v901 = vand.u32 %v348, 4294901760
        %902 = vmatpush1.msra.mxu0 %v901
        %903 = vmatprep.subr.mxu0 0.0
        %v904 = vand.u32 %v349, 4294901760
        %905 = vmatpush1.msra.mxu0 %v904
        %906 = vmatprep.subr.mxu0 0.0
        %907 = vmatpush1.msra.mxu0 0.0
        %908 = vmatprep.subr.mxu0 0.0
        %909 = vmatpush1.msra.mxu0 0.0
        %910 = vmatprep.subr.mxu0 0.0
        %911 = vmatpush1.msra.mxu0 0.0
        %912 = vmatprep.subr.mxu0 0.0
        %913 = vmatpush1.msra.mxu0 0.0
        %914 = vmatprep.subr.mxu0 0.0
        %915 = vmatpush1.msra.mxu0 0.0
        %916 = vmatprep.subr.mxu0 0.0
        %917 = vmatpush1.msra.mxu0 0.0
        %918 = vmatprep.subr.mxu0 0.0
        %919 = vmatpush1.msra.mxu0 0.0
        %920 = vmatprep.subr.mxu0 0.0
        %921 = vmatpush1.msra.mxu0 0.0
        %922 = vmatprep.subr.mxu0 0.0
        %923 = vmatpush1.msra.mxu0 0.0
        %924 = vmatprep.subr.mxu0 0.0
        %925 = vmatpush1.msra.mxu0 0.0
        %926 = vmatprep.subr.mxu0 0.0
        %927 = vmatpush1.msra.mxu0 0.0
        %928 = vmatprep.subr.mxu0 0.0
        %929 = vmatpush1.msra.mxu0 0.0
        %930 = vmatprep.subr.mxu0 0.0
        %931 = vmatpush1.msra.mxu0 0.0
        %932 = vmatprep.subr.mxu0 0.0
        %933 = vmatpush1.msra.mxu0 0.0
        %934 = vmatprep.subr.mxu0 0.0
        %935 = vmatpush1.msra.mxu0 0.0
        %936 = vmatprep.subr.mxu0 0.0
        %937 = vmatpush1.msra.mxu0 0.0
        %938 = vmatprep.mubr.f32.mxu0 0.0
        %v939 = vand.u32 %v326, 4294901760
        %v940 = vsub.f32 %v326, %v939
        %v941 = vand.u32 %v940, 4294901760
        %942 = vmatmul.mubr.f32.gmra.mrb[0].mxu0 %v941
        %v943 = vpop.f32.mrb[0].mxu0
        %v944 = vadd.f32 %v806, %v943
        %v945 = vpop.f32.mrb[0].mxu0
        %946 = vmatprep.mubr.f32.mxu0 0.0
        %v947 = vand.u32 %v327, 4294901760
        %v948 = vsub.f32 %v327, %v947
        %v949 = vand.u32 %v948, 4294901760
        %950 = vmatmul.mubr.f32.gmra.mrb[0].mxu0 %v949
        %v951 = vpop.f32.mrb[0].mxu0
        %v952 = vadd.f32 %v813, %v951
        %v953 = vpop.f32.mrb[0].mxu0
        %954 = vmatprep.mubr.f32.mxu0 0.0
        %v955 = vand.u32 %v328, 4294901760
        %v956 = vsub.f32 %v328, %v955
        %v957 = vand.u32 %v956, 4294901760
        %958 = vmatmul.mubr.f32.gmra.mrb[0].mxu0 %v957
        %v959 = vpop.f32.mrb[0].mxu0
        %v960 = vadd.f32 %v820, %v959
        %v961 = vpop.f32.mrb[0].mxu0
        %962 = vmatprep.mubr.f32.mxu0 0.0
        %v963 = vand.u32 %v329, 4294901760
        %v964 = vsub.f32 %v329, %v963
        %v965 = vand.u32 %v964, 4294901760
        %966 = vmatmul.mubr.f32.gmra.mrb[0].mxu0 %v965
        %v967 = vpop.f32.mrb[0].mxu0
        %v968 = vadd.f32 %v827, %v967
        %v969 = vpop.f32.mrb[0].mxu0
        %970 = vmatprep.mubr.f32.mxu0 0.0
        %v971 = vand.u32 %v330, 4294901760
        %v972 = vsub.f32 %v330, %v971
        %v973 = vand.u32 %v972, 4294901760
        %974 = vmatmul.mubr.f32.gmra.mrb[0].mxu0 %v973
        %v975 = vpop.f32.mrb[0].mxu0
        %v976 = vadd.f32 %v834, %v975
        %v977 = vpop.f32.mrb[0].mxu0
        %978 = vmatprep.mubr.f32.mxu0 0.0
        %v979 = vand.u32 %v331, 4294901760
        %v980 = vsub.f32 %v331, %v979
        %v981 = vand.u32 %v980, 4294901760
        %982 = vmatmul.mubr.f32.gmra.mrb[0].mxu0 %v981
        %v983 = vpop.f32.mrb[0].mxu0
        %v984 = vadd.f32 %v841, %v983
        %v985 = vpop.f32.mrb[0].mxu0
        %986 = vmatprep.mubr.f32.mxu0 0.0
        %v987 = vand.u32 %v332, 4294901760
        %v988 = vsub.f32 %v332, %v987
        %v989 = vand.u32 %v988, 4294901760
        %990 = vmatmul.mubr.f32.gmra.mrb[0].mxu0 %v989
        %v991 = vpop.f32.mrb[0].mxu0
        %v992 = vadd.f32 %v848, %v991
        %v993 = vpop.f32.mrb[0].mxu0
        %994 = vmatprep.mubr.f32.mxu0 0.0
        %v995 = vand.u32 %v333, 4294901760
        %v996 = vsub.f32 %v333, %v995
        %v997 = vand.u32 %v996, 4294901760
        %998 = vmatmul.mubr.f32.gmra.mrb[0].mxu0 %v997
        %v999 = vpop.f32.mrb[0].mxu0
        %v1000 = vadd.f32 %v855, %v999
        %v1001 = vpop.f32.mrb[0].mxu0
        %1002 = vdwg.mxu0
        %1003 = vmatprep.subr.mxu0 0.0
        %v1004 = vand.u32 %v334, 4294901760
        %v1005 = vsub.f32 %v334, %v1004
        %v1006 = vand.u32 %v1005, 4294901760
        %1007 = vmatpush1.msra.mxu0 %v1006
        %1008 = vmatprep.subr.mxu0 0.0
        %v1009 = vand.u32 %v335, 4294901760
        %v1010 = vsub.f32 %v335, %v1009
        %v1011 = vand.u32 %v1010, 4294901760
        %1012 = vmatpush1.msra.mxu0 %v1011
        %1013 = vmatprep.subr.mxu0 0.0
        %v1014 = vand.u32 %v336, 4294901760
        %v1015 = vsub.f32 %v336, %v1014
        %v1016 = vand.u32 %v1015, 4294901760
        %1017 = vmatpush1.msra.mxu0 %v1016
        %1018 = vmatprep.subr.mxu0 0.0
        %v1019 = vand.u32 %v337, 4294901760
        %v1020 = vsub.f32 %v337, %v1019
        %v1021 = vand.u32 %v1020, 4294901760
        %1022 = vmatpush1.msra.mxu0 %v1021
        %1023 = vmatprep.subr.mxu0 0.0
        %v1024 = vand.u32 %v338, 4294901760
        %v1025 = vsub.f32 %v338, %v1024
        %v1026 = vand.u32 %v1025, 4294901760
        %1027 = vmatpush1.msra.mxu0 %v1026
        %1028 = vmatprep.subr.mxu0 0.0
        %v1029 = vand.u32 %v339, 4294901760
        %v1030 = vsub.f32 %v339, %v1029
        %v1031 = vand.u32 %v1030, 4294901760
        %1032 = vmatpush1.msra.mxu0 %v1031
        %1033 = vmatprep.subr.mxu0 0.0
        %v1034 = vand.u32 %v340, 4294901760
        %v1035 = vsub.f32 %v340, %v1034
        %v1036 = vand.u32 %v1035, 4294901760
        %1037 = vmatpush1.msra.mxu0 %v1036
        %1038 = vmatprep.subr.mxu0 0.0
        %v1039 = vand.u32 %v341, 4294901760
        %v1040 = vsub.f32 %v341, %v1039
        %v1041 = vand.u32 %v1040, 4294901760
        %1042 = vmatpush1.msra.mxu0 %v1041
        %1043 = vmatprep.subr.mxu0 0.0
        %v1044 = vand.u32 %v342, 4294901760
        %v1045 = vsub.f32 %v342, %v1044
        %v1046 = vand.u32 %v1045, 4294901760
        %1047 = vmatpush1.msra.mxu0 %v1046
        %1048 = vmatprep.subr.mxu0 0.0
        %v1049 = vand.u32 %v343, 4294901760
        %v1050 = vsub.f32 %v343, %v1049
        %v1051 = vand.u32 %v1050, 4294901760
        %1052 = vmatpush1.msra.mxu0 %v1051
        %1053 = vmatprep.subr.mxu0 0.0
        %v1054 = vand.u32 %v344, 4294901760
        %v1055 = vsub.f32 %v344, %v1054
        %v1056 = vand.u32 %v1055, 4294901760
        %1057 = vmatpush1.msra.mxu0 %v1056
        %1058 = vmatprep.subr.mxu0 0.0
        %v1059 = vand.u32 %v345, 4294901760
        %v1060 = vsub.f32 %v345, %v1059
        %v1061 = vand.u32 %v1060, 4294901760
        %1062 = vmatpush1.msra.mxu0 %v1061
        %1063 = vmatprep.subr.mxu0 0.0
        %v1064 = vand.u32 %v346, 4294901760
        %v1065 = vsub.f32 %v346, %v1064
        %v1066 = vand.u32 %v1065, 4294901760
        %1067 = vmatpush1.msra.mxu0 %v1066
        %1068 = vmatprep.subr.mxu0 0.0
        %v1069 = vand.u32 %v347, 4294901760
        %v1070 = vsub.f32 %v347, %v1069
        %v1071 = vand.u32 %v1070, 4294901760
        %1072 = vmatpush1.msra.mxu0 %v1071
        %1073 = vmatprep.subr.mxu0 0.0
        %v1074 = vand.u32 %v348, 4294901760
        %v1075 = vsub.f32 %v348, %v1074
        %v1076 = vand.u32 %v1075, 4294901760
        %1077 = vmatpush1.msra.mxu0 %v1076
        %1078 = vmatprep.subr.mxu0 0.0
        %v1079 = vand.u32 %v349, 4294901760
        %v1080 = vsub.f32 %v349, %v1079
        %v1081 = vand.u32 %v1080, 4294901760
        %1082 = vmatpush1.msra.mxu0 %v1081
        %1083 = vmatprep.subr.mxu0 0.0
        %1084 = vmatpush1.msra.mxu0 0.0
        %1085 = vmatprep.subr.mxu0 0.0
        %1086 = vmatpush1.msra.mxu0 0.0
        %1087 = vmatprep.subr.mxu0 0.0
        %1088 = vmatpush1.msra.mxu0 0.0
        %1089 = vmatprep.subr.mxu0 0.0
        %1090 = vmatpush1.msra.mxu0 0.0
        %1091 = vmatprep.subr.mxu0 0.0
        %1092 = vmatpush1.msra.mxu0 0.0
        %1093 = vmatprep.subr.mxu0 0.0
        %1094 = vmatpush1.msra.mxu0 0.0
        %1095 = vmatprep.subr.mxu0 0.0
        %1096 = vmatpush1.msra.mxu0 0.0
        %1097 = vmatprep.subr.mxu0 0.0
        %1098 = vmatpush1.msra.mxu0 0.0
        %1099 = vmatprep.subr.mxu0 0.0
        %1100 = vmatpush1.msra.mxu0 0.0
        %1101 = vmatprep.subr.mxu0 0.0
        %1102 = vmatpush1.msra.mxu0 0.0
        %1103 = vmatprep.subr.mxu0 0.0
        %1104 = vmatpush1.msra.mxu0 0.0
        %1105 = vmatprep.subr.mxu0 0.0
        %1106 = vmatpush1.msra.mxu0 0.0
        %1107 = vmatprep.subr.mxu0 0.0
        %1108 = vmatpush1.msra.mxu0 0.0
        %1109 = vmatprep.subr.mxu0 0.0
        %1110 = vmatpush1.msra.mxu0 0.0
        %1111 = vmatprep.subr.mxu0 0.0
        %1112 = vmatpush1.msra.mxu0 0.0
        %1113 = vmatprep.subr.mxu0 0.0
        %1114 = vmatpush1.msra.mxu0 0.0
        %1115 = vmatprep.mubr.f32.mxu0 0.0
        %v1116 = vand.u32 %v326, 4294901760
        %1117 = vmatmul.mubr.f32.gmra.mrb[0].mxu0 %v1116
        %v1118 = vpop.f32.mrb[0].mxu0
        %v1119 = vadd.f32 %v944, %v1118
        %v1120 = vpop.f32.mrb[0].mxu0
        %1121 = vmatprep.mubr.f32.mxu0 0.0
        %v1122 = vand.u32 %v327, 4294901760
        %1123 = vmatmul.mubr.f32.gmra.mrb[0].mxu0 %v1122
        %v1124 = vpop.f32.mrb[0].mxu0
        %v1125 = vadd.f32 %v952, %v1124
        %v1126 = vpop.f32.mrb[0].mxu0
        %1127 = vmatprep.mubr.f32.mxu0 0.0
        %v1128 = vand.u32 %v328, 4294901760
        %1129 = vmatmul.mubr.f32.gmra.mrb[0].mxu0 %v1128
        %v1130 = vpop.f32.mrb[0].mxu0
        %v1131 = vadd.f32 %v960, %v1130
        %v1132 = vpop.f32.mrb[0].mxu0
        %1133 = vmatprep.mubr.f32.mxu0 0.0
        %v1134 = vand.u32 %v329, 4294901760
        %1135 = vmatmul.mubr.f32.gmra.mrb[0].mxu0 %v1134
        %v1136 = vpop.f32.mrb[0].mxu0
        %v1137 = vadd.f32 %v968, %v1136
        %v1138 = vpop.f32.mrb[0].mxu0
        %1139 = vmatprep.mubr.f32.mxu0 0.0
        %v1140 = vand.u32 %v330, 4294901760
        %1141 = vmatmul.mubr.f32.gmra.mrb[0].mxu0 %v1140
        %v1142 = vpop.f32.mrb[0].mxu0
        %v1143 = vadd.f32 %v976, %v1142
        %v1144 = vpop.f32.mrb[0].mxu0
        %1145 = vmatprep.mubr.f32.mxu0 0.0
        %v1146 = vand.u32 %v331, 4294901760
        %1147 = vmatmul.mubr.f32.gmra.mrb[0].mxu0 %v1146
        %v1148 = vpop.f32.mrb[0].mxu0
        %v1149 = vadd.f32 %v984, %v1148
        %v1150 = vpop.f32.mrb[0].mxu0
        %1151 = vmatprep.mubr.f32.mxu0 0.0
        %v1152 = vand.u32 %v332, 4294901760
        %1153 = vmatmul.mubr.f32.gmra.mrb[0].mxu0 %v1152
        %v1154 = vpop.f32.mrb[0].mxu0
        %v1155 = vadd.f32 %v992, %v1154
        %v1156 = vpop.f32.mrb[0].mxu0
        %1157 = vmatprep.mubr.f32.mxu0 0.0
        %v1158 = vand.u32 %v333, 4294901760
        %1159 = vmatmul.mubr.f32.gmra.mrb[0].mxu0 %v1158
        %v1160 = vpop.f32.mrb[0].mxu0
        %v1161 = vadd.f32 %v1000, %v1160
        %v1162 = vpop.f32.mrb[0].mxu0
        %1163 = vdwg.mxu0
        %1164 = vmatprep.subr.mxu0 0.0
        %v1165 = vand.u32 %v334, 4294901760
        %1166 = vmatpush1.msra.mxu0 %v1165
        %1167 = vmatprep.subr.mxu0 0.0
        %v1168 = vand.u32 %v335, 4294901760
        %1169 = vmatpush1.msra.mxu0 %v1168
        %1170 = vmatprep.subr.mxu0 0.0
        %v1171 = vand.u32 %v336, 4294901760
        %1172 = vmatpush1.msra.mxu0 %v1171
        %1173 = vmatprep.subr.mxu0 0.0
        %v1174 = vand.u32 %v337, 4294901760
        %1175 = vmatpush1.msra.mxu0 %v1174
        %1176 = vmatprep.subr.mxu0 0.0
        %v1177 = vand.u32 %v338, 4294901760
        %1178 = vmatpush1.msra.mxu0 %v1177
        %1179 = vmatprep.subr.mxu0 0.0
        %v1180 = vand.u32 %v339, 4294901760
        %1181 = vmatpush1.msra.mxu0 %v1180
        %1182 = vmatprep.subr.mxu0 0.0
        %v1183 = vand.u32 %v340, 4294901760
        %1184 = vmatpush1.msra.mxu0 %v1183
        %1185 = vmatprep.subr.mxu0 0.0
        %v1186 = vand.u32 %v341, 4294901760
        %1187 = vmatpush1.msra.mxu0 %v1186
        %1188 = vmatprep.subr.mxu0 0.0
        %v1189 = vand.u32 %v342, 4294901760
        %1190 = vmatpush1.msra.mxu0 %v1189
        %1191 = vmatprep.subr.mxu0 0.0
        %v1192 = vand.u32 %v343, 4294901760
        %1193 = vmatpush1.msra.mxu0 %v1192
        %1194 = vmatprep.subr.mxu0 0.0
        %v1195 = vand.u32 %v344, 4294901760
        %1196 = vmatpush1.msra.mxu0 %v1195
        %1197 = vmatprep.subr.mxu0 0.0
        %v1198 = vand.u32 %v345, 4294901760
        %1199 = vmatpush1.msra.mxu0 %v1198
        %1200 = vmatprep.subr.mxu0 0.0
        %v1201 = vand.u32 %v346, 4294901760
        %1202 = vmatpush1.msra.mxu0 %v1201
        %1203 = vmatprep.subr.mxu0 0.0
        %v1204 = vand.u32 %v347, 4294901760
        %1205 = vmatpush1.msra.mxu0 %v1204
        %1206 = vmatprep.subr.mxu0 0.0
        %v1207 = vand.u32 %v348, 4294901760
        %1208 = vmatpush1.msra.mxu0 %v1207
        %1209 = vmatprep.subr.mxu0 0.0
        %v1210 = vand.u32 %v349, 4294901760
        %1211 = vmatpush1.msra.mxu0 %v1210
        %1212 = vmatprep.subr.mxu0 0.0
        %1213 = vmatpush1.msra.mxu0 0.0
        %1214 = vmatprep.subr.mxu0 0.0
        %1215 = vmatpush1.msra.mxu0 0.0
        %1216 = vmatprep.subr.mxu0 0.0
        %1217 = vmatpush1.msra.mxu0 0.0
        %1218 = vmatprep.subr.mxu0 0.0
        %1219 = vmatpush1.msra.mxu0 0.0
        %1220 = vmatprep.subr.mxu0 0.0
        %1221 = vmatpush1.msra.mxu0 0.0
        %1222 = vmatprep.subr.mxu0 0.0
        %1223 = vmatpush1.msra.mxu0 0.0
        %1224 = vmatprep.subr.mxu0 0.0
        %1225 = vmatpush1.msra.mxu0 0.0
        %1226 = vmatprep.subr.mxu0 0.0
        %1227 = vmatpush1.msra.mxu0 0.0
        %1228 = vmatprep.subr.mxu0 0.0
        %1229 = vmatpush1.msra.mxu0 0.0
        %1230 = vmatprep.subr.mxu0 0.0
        %1231 = vmatpush1.msra.mxu0 0.0
        %1232 = vmatprep.subr.mxu0 0.0
        %1233 = vmatpush1.msra.mxu0 0.0
        %1234 = vmatprep.subr.mxu0 0.0
        %1235 = vmatpush1.msra.mxu0 0.0
        %1236 = vmatprep.subr.mxu0 0.0
        %1237 = vmatpush1.msra.mxu0 0.0
        %1238 = vmatprep.subr.mxu0 0.0
        %1239 = vmatpush1.msra.mxu0 0.0
        %1240 = vmatprep.subr.mxu0 0.0
        %1241 = vmatpush1.msra.mxu0 0.0
        %1242 = vmatprep.subr.mxu0 0.0
        %1243 = vmatpush1.msra.mxu0 0.0
        %1244 = vmatprep.mubr.f32.mxu0 0.0
        %v1245 = vand.u32 %v326, 4294901760
        %1246 = vmatmul.mubr.f32.gmra.mrb[0].mxu0 %v1245
        %v1247 = vpop.f32.mrb[0].mxu0
        %v1248 = vadd.f32 %v1119, %v1247
        %v1249 = vpop.f32.mrb[0].mxu0
        %1250 = vmatprep.mubr.f32.mxu0 0.0
        %v1251 = vand.u32 %v327, 4294901760
        %1252 = vmatmul.mubr.f32.gmra.mrb[0].mxu0 %v1251
        %v1253 = vpop.f32.mrb[0].mxu0
        %v1254 = vadd.f32 %v1125, %v1253
        %v1255 = vpop.f32.mrb[0].mxu0
        %1256 = vmatprep.mubr.f32.mxu0 0.0
        %v1257 = vand.u32 %v328, 4294901760
        %1258 = vmatmul.mubr.f32.gmra.mrb[0].mxu0 %v1257
        %v1259 = vpop.f32.mrb[0].mxu0
        %v1260 = vadd.f32 %v1131, %v1259
        %v1261 = vpop.f32.mrb[0].mxu0
        %1262 = vmatprep.mubr.f32.mxu0 0.0
        %v1263 = vand.u32 %v329, 4294901760
        %1264 = vmatmul.mubr.f32.gmra.mrb[0].mxu0 %v1263
        %v1265 = vpop.f32.mrb[0].mxu0
        %v1266 = vadd.f32 %v1137, %v1265
        %v1267 = vpop.f32.mrb[0].mxu0
        %1268 = vmatprep.mubr.f32.mxu0 0.0
        %v1269 = vand.u32 %v330, 4294901760
        %1270 = vmatmul.mubr.f32.gmra.mrb[0].mxu0 %v1269
        %v1271 = vpop.f32.mrb[0].mxu0
        %v1272 = vadd.f32 %v1143, %v1271
        %v1273 = vpop.f32.mrb[0].mxu0
        %1274 = vmatprep.mubr.f32.mxu0 0.0
        %v1275 = vand.u32 %v331, 4294901760
        %1276 = vmatmul.mubr.f32.gmra.mrb[0].mxu0 %v1275
        %v1277 = vpop.f32.mrb[0].mxu0
        %v1278 = vadd.f32 %v1149, %v1277
        %v1279 = vpop.f32.mrb[0].mxu0
        %1280 = vmatprep.mubr.f32.mxu0 0.0
        %v1281 = vand.u32 %v332, 4294901760
        %1282 = vmatmul.mubr.f32.gmra.mrb[0].mxu0 %v1281
        %v1283 = vpop.f32.mrb[0].mxu0
        %v1284 = vadd.f32 %v1155, %v1283
        %v1285 = vpop.f32.mrb[0].mxu0
        %1286 = vmatprep.mubr.f32.mxu0 0.0
        %v1287 = vand.u32 %v333, 4294901760
        %1288 = vmatmul.mubr.f32.gmra.mrb[0].mxu0 %v1287
        %v1289 = vpop.f32.mrb[0].mxu0
        %v1290 = vadd.f32 %v1161, %v1289
        %v1291 = vpop.f32.mrb[0].mxu0
        %1292 = vdwg.mxu0
        %v1293 = vtanh.pop %v1248
        %v1294 = vtanh.pop %v1254
        %v1295 = vtanh.pop %v1260
        %v1296 = vtanh.pop %v1266
        %v1297 = vtanh.pop %v1272
        %v1298 = vtanh.pop %v1278
        %v1299 = vtanh.pop %v1284
        %v1300 = vtanh.pop %v1290
        %v1301 = vld [vmem:[%s5] sm:$0xf]
        %vm1302 = vcmask 31744
        %v1304 = vsel %vm1302, %v1293, 0
        %v1307 = vsel %vm1302, %v1294, 0
        %v1310 = vsel %vm1302, %v1295, 0
        %v1313 = vsel %vm1302, %v1296, 0
        %v1316 = vsel %vm1302, %v1297, 0
        %v1319 = vsel %vm1302, %v1298, 0
        %v1322 = vsel %vm1302, %v1299, 0
        %v1325 = vsel %vm1302, %v1300, 0
        %vm1327 = vcmask 1043456
        %v1329 = vsel %vm1327, %v1301, 0
        %1331 = vmatprep.subr.mxu0 0.0
        %v1332 = vand.u32 %v1329, 4294901760
        %1333 = vmatpush1.msra.mxu0 %v1332
        %1334 = vmatprep.subr.mxu0 0.0
        %1335 = vmatpush1.msra.mxu0 0.0
        %1336 = vmatprep.subr.mxu0 0.0
        %1337 = vmatpush1.msra.mxu0 0.0
        %1338 = vmatprep.subr.mxu0 0.0
        %1339 = vmatpush1.msra.mxu0 0.0
        %1340 = vmatprep.subr.mxu0 0.0
        %1341 = vmatpush1.msra.mxu0 0.0
        %1342 = vmatprep.subr.mxu0 0.0
        %1343 = vmatpush1.msra.mxu0 0.0
        %1344 = vmatprep.subr.mxu0 0.0
        %1345 = vmatpush1.msra.mxu0 0.0
        %1346 = vmatprep.subr.mxu0 0.0
        %1347 = vmatpush1.msra.mxu0 0.0
        %1348 = vmatprep.subr.mxu0 0.0
        %1349 = vmatpush1.msra.mxu0 0.0
        %1350 = vmatprep.subr.mxu0 0.0
        %1351 = vmatpush1.msra.mxu0 0.0
        %1352 = vmatprep.subr.mxu0 0.0
        %1353 = vmatpush1.msra.mxu0 0.0
        %1354 = vmatprep.subr.mxu0 0.0
        %1355 = vmatpush1.msra.mxu0 0.0
        %1356 = vmatprep.subr.mxu0 0.0
        %1357 = vmatpush1.msra.mxu0 0.0
        %1358 = vmatprep.subr.mxu0 0.0
        %1359 = vmatpush1.msra.mxu0 0.0
        %1360 = vmatprep.subr.mxu0 0.0
        %1361 = vmatpush1.msra.mxu0 0.0
        %1362 = vmatprep.subr.mxu0 0.0
        %1363 = vmatpush1.msra.mxu0 0.0
        %1364 = vmatprep.subr.mxu0 0.0
        %1365 = vmatpush1.msra.mxu0 0.0
        %1366 = vmatprep.subr.mxu0 0.0
        %1367 = vmatpush1.msra.mxu0 0.0
        %1368 = vmatprep.subr.mxu0 0.0
        %1369 = vmatpush1.msra.mxu0 0.0
        %1370 = vmatprep.subr.mxu0 0.0
        %1371 = vmatpush1.msra.mxu0 0.0
        %1372 = vmatprep.subr.mxu0 0.0
        %1373 = vmatpush1.msra.mxu0 0.0
        %1374 = vmatprep.subr.mxu0 0.0
        %1375 = vmatpush1.msra.mxu0 0.0
        %1376 = vmatprep.subr.mxu0 0.0
        %1377 = vmatpush1.msra.mxu0 0.0
        %1378 = vmatprep.subr.mxu0 0.0
        %1379 = vmatpush1.msra.mxu0 0.0
        %1380 = vmatprep.subr.mxu0 0.0
        %1381 = vmatpush1.msra.mxu0 0.0
        %1382 = vmatprep.subr.mxu0 0.0
        %1383 = vmatpush1.msra.mxu0 0.0
        %1384 = vmatprep.subr.mxu0 0.0
        %1385 = vmatpush1.msra.mxu0 0.0
        %1386 = vmatprep.subr.mxu0 0.0
        %1387 = vmatpush1.msra.mxu0 0.0
        %1388 = vmatprep.subr.mxu0 0.0
        %1389 = vmatpush1.msra.mxu0 0.0
        %1390 = vmatprep.subr.mxu0 0.0
        %1391 = vmatpush1.msra.mxu0 0.0
        %1392 = vmatprep.subr.mxu0 0.0
        %1393 = vmatpush1.msra.mxu0 0.0
        %1394 = vmatprep.subr.mxu0 0.0
        %1395 = vmatpush1.msra.mxu0 0.0
        %1396 = vmatprep.mubr.f32.mxu0 0.0
        %v1397 = vand.u32 %v1304, 4294901760
        %v1398 = vsub.f32 %v1304, %v1397
        %v1399 = vand.u32 %v1398, 4294901760
        %v1400 = vsub.f32 %v1398, %v1399
        %v1401 = vand.u32 %v1400, 4294901760
        %1402 = vmatmul.mubr.f32.gmra.mrb[0].mxu0 %v1401
        %v1403 = vpop.f32.mrb[0].mxu0
        %v1404 = vadd.f32 0.0, %v1403
        %v1405 = vpop.f32.mrb[0].mxu0
        %1406 = vmatprep.mubr.f32.mxu0 0.0
        %v1407 = vand.u32 %v1307, 4294901760
        %v1408 = vsub.f32 %v1307, %v1407
        %v1409 = vand.u32 %v1408, 4294901760
        %v1410 = vsub.f32 %v1408, %v1409
        %v1411 = vand.u32 %v1410, 4294901760
        %1412 = vmatmul.mubr.f32.gmra.mrb[0].mxu0 %v1411
        %v1413 = vpop.f32.mrb[0].mxu0
        %v1414 = vadd.f32 0.0, %v1413
        %v1415 = vpop.f32.mrb[0].mxu0
        %1416 = vmatprep.mubr.f32.mxu0 0.0
        %v1417 = vand.u32 %v1310, 4294901760
        %v1418 = vsub.f32 %v1310, %v1417
        %v1419 = vand.u32 %v1418, 4294901760
        %v1420 = vsub.f32 %v1418, %v1419
        %v1421 = vand.u32 %v1420, 4294901760
        %1422 = vmatmul.mubr.f32.gmra.mrb[0].mxu0 %v1421
        %v1423 = vpop.f32.mrb[0].mxu0
        %v1424 = vadd.f32 0.0, %v1423
        %v1425 = vpop.f32.mrb[0].mxu0
        %1426 = vmatprep.mubr.f32.mxu0 0.0
        %v1427 = vand.u32 %v1313, 4294901760
        %v1428 = vsub.f32 %v1313, %v1427
        %v1429 = vand.u32 %v1428, 4294901760
        %v1430 = vsub.f32 %v1428, %v1429
        %v1431 = vand.u32 %v1430, 4294901760
        %1432 = vmatmul.mubr.f32.gmra.mrb[0].mxu0 %v1431
        %v1433 = vpop.f32.mrb[0].mxu0
        %v1434 = vadd.f32 0.0, %v1433
        %v1435 = vpop.f32.mrb[0].mxu0
        %1436 = vmatprep.mubr.f32.mxu0 0.0
        %v1437 = vand.u32 %v1316, 4294901760
        %v1438 = vsub.f32 %v1316, %v1437
        %v1439 = vand.u32 %v1438, 4294901760
        %v1440 = vsub.f32 %v1438, %v1439
        %v1441 = vand.u32 %v1440, 4294901760
        %1442 = vmatmul.mubr.f32.gmra.mrb[0].mxu0 %v1441
        %v1443 = vpop.f32.mrb[0].mxu0
        %v1444 = vadd.f32 0.0, %v1443
        %v1445 = vpop.f32.mrb[0].mxu0
        %1446 = vmatprep.mubr.f32.mxu0 0.0
        %v1447 = vand.u32 %v1319, 4294901760
        %v1448 = vsub.f32 %v1319, %v1447
        %v1449 = vand.u32 %v1448, 4294901760
        %v1450 = vsub.f32 %v1448, %v1449
        %v1451 = vand.u32 %v1450, 4294901760
        %1452 = vmatmul.mubr.f32.gmra.mrb[0].mxu0 %v1451
        %v1453 = vpop.f32.mrb[0].mxu0
        %v1454 = vadd.f32 0.0, %v1453
        %v1455 = vpop.f32.mrb[0].mxu0
        %1456 = vmatprep.mubr.f32.mxu0 0.0
        %v1457 = vand.u32 %v1322, 4294901760
        %v1458 = vsub.f32 %v1322, %v1457
        %v1459 = vand.u32 %v1458, 4294901760
        %v1460 = vsub.f32 %v1458, %v1459
        %v1461 = vand.u32 %v1460, 4294901760
        %1462 = vmatmul.mubr.f32.gmra.mrb[0].mxu0 %v1461
        %v1463 = vpop.f32.mrb[0].mxu0
        %v1464 = vadd.f32 0.0, %v1463
        %v1465 = vpop.f32.mrb[0].mxu0
        %1466 = vmatprep.mubr.f32.mxu0 0.0
        %v1467 = vand.u32 %v1325, 4294901760
        %v1468 = vsub.f32 %v1325, %v1467
        %v1469 = vand.u32 %v1468, 4294901760
        %v1470 = vsub.f32 %v1468, %v1469
        %v1471 = vand.u32 %v1470, 4294901760
        %1472 = vmatmul.mubr.f32.gmra.mrb[0].mxu0 %v1471
        %v1473 = vpop.f32.mrb[0].mxu0
        %v1474 = vadd.f32 0.0, %v1473
        %v1475 = vpop.f32.mrb[0].mxu0
        %1476 = vdwg.mxu0
        %1477 = vmatprep.subr.mxu0 0.0
        %v1478 = vand.u32 %v1329, 4294901760
        %v1479 = vsub.f32 %v1329, %v1478
        %v1480 = vand.u32 %v1479, 4294901760
        %v1481 = vsub.f32 %v1479, %v1480
        %v1482 = vand.u32 %v1481, 4294901760
        %1483 = vmatpush1.msra.mxu0 %v1482
        %1484 = vmatprep.subr.mxu0 0.0
        %1485 = vmatpush1.msra.mxu0 0.0
        %1486 = vmatprep.subr.mxu0 0.0
        %1487 = vmatpush1.msra.mxu0 0.0
        %1488 = vmatprep.subr.mxu0 0.0
        %1489 = vmatpush1.msra.mxu0 0.0
        %1490 = vmatprep.subr.mxu0 0.0
        %1491 = vmatpush1.msra.mxu0 0.0
        %1492 = vmatprep.subr.mxu0 0.0
        %1493 = vmatpush1.msra.mxu0 0.0
        %1494 = vmatprep.subr.mxu0 0.0
        %1495 = vmatpush1.msra.mxu0 0.0
        %1496 = vmatprep.subr.mxu0 0.0
        %1497 = vmatpush1.msra.mxu0 0.0
        %1498 = vmatprep.subr.mxu0 0.0
        %1499 = vmatpush1.msra.mxu0 0.0
        %1500 = vmatprep.subr.mxu0 0.0
        %1501 = vmatpush1.msra.mxu0 0.0
        %1502 = vmatprep.subr.mxu0 0.0
        %1503 = vmatpush1.msra.mxu0 0.0
        %1504 = vmatprep.subr.mxu0 0.0
        %1505 = vmatpush1.msra.mxu0 0.0
        %1506 = vmatprep.subr.mxu0 0.0
        %1507 = vmatpush1.msra.mxu0 0.0
        %1508 = vmatprep.subr.mxu0 0.0
        %1509 = vmatpush1.msra.mxu0 0.0
        %1510 = vmatprep.subr.mxu0 0.0
        %1511 = vmatpush1.msra.mxu0 0.0
        %1512 = vmatprep.subr.mxu0 0.0
        %1513 = vmatpush1.msra.mxu0 0.0
        %1514 = vmatprep.subr.mxu0 0.0
        %1515 = vmatpush1.msra.mxu0 0.0
        %1516 = vmatprep.subr.mxu0 0.0
        %1517 = vmatpush1.msra.mxu0 0.0
        %1518 = vmatprep.subr.mxu0 0.0
        %1519 = vmatpush1.msra.mxu0 0.0
        %1520 = vmatprep.subr.mxu0 0.0
        %1521 = vmatpush1.msra.mxu0 0.0
        %1522 = vmatprep.subr.mxu0 0.0
        %1523 = vmatpush1.msra.mxu0 0.0
        %1524 = vmatprep.subr.mxu0 0.0
        %1525 = vmatpush1.msra.mxu0 0.0
        %1526 = vmatprep.subr.mxu0 0.0
        %1527 = vmatpush1.msra.mxu0 0.0
        %1528 = vmatprep.subr.mxu0 0.0
        %1529 = vmatpush1.msra.mxu0 0.0
        %1530 = vmatprep.subr.mxu0 0.0
        %1531 = vmatpush1.msra.mxu0 0.0
        %1532 = vmatprep.subr.mxu0 0.0
        %1533 = vmatpush1.msra.mxu0 0.0
        %1534 = vmatprep.subr.mxu0 0.0
        %1535 = vmatpush1.msra.mxu0 0.0
        %1536 = vmatprep.subr.mxu0 0.0
        %1537 = vmatpush1.msra.mxu0 0.0
        %1538 = vmatprep.subr.mxu0 0.0
        %1539 = vmatpush1.msra.mxu0 0.0
        %1540 = vmatprep.subr.mxu0 0.0
        %1541 = vmatpush1.msra.mxu0 0.0
        %1542 = vmatprep.subr.mxu0 0.0
        %1543 = vmatpush1.msra.mxu0 0.0
        %1544 = vmatprep.subr.mxu0 0.0
        %1545 = vmatpush1.msra.mxu0 0.0
        %1546 = vmatprep.mubr.f32.mxu0 0.0
        %v1547 = vand.u32 %v1304, 4294901760
        %1548 = vmatmul.mubr.f32.gmra.mrb[0].mxu0 %v1547
        %v1549 = vpop.f32.mrb[0].mxu0
        %v1550 = vadd.f32 %v1404, %v1549
        %v1551 = vpop.f32.mrb[0].mxu0
        %1552 = vmatprep.mubr.f32.mxu0 0.0
        %v1553 = vand.u32 %v1307, 4294901760
        %1554 = vmatmul.mubr.f32.gmra.mrb[0].mxu0 %v1553
        %v1555 = vpop.f32.mrb[0].mxu0
        %v1556 = vadd.f32 %v1414, %v1555
        %v1557 = vpop.f32.mrb[0].mxu0
        %1558 = vmatprep.mubr.f32.mxu0 0.0
        %v1559 = vand.u32 %v1310, 4294901760
        %1560 = vmatmul.mubr.f32.gmra.mrb[0].mxu0 %v1559
        %v1561 = vpop.f32.mrb[0].mxu0
        %v1562 = vadd.f32 %v1424, %v1561
        %v1563 = vpop.f32.mrb[0].mxu0
        %1564 = vmatprep.mubr.f32.mxu0 0.0
        %v1565 = vand.u32 %v1313, 4294901760
        %1566 = vmatmul.mubr.f32.gmra.mrb[0].mxu0 %v1565
        %v1567 = vpop.f32.mrb[0].mxu0
        %v1568 = vadd.f32 %v1434, %v1567
        %v1569 = vpop.f32.mrb[0].mxu0
        %1570 = vmatprep.mubr.f32.mxu0 0.0
        %v1571 = vand.u32 %v1316, 4294901760
        %1572 = vmatmul.mubr.f32.gmra.mrb[0].mxu0 %v1571
        %v1573 = vpop.f32.mrb[0].mxu0
        %v1574 = vadd.f32 %v1444, %v1573
        %v1575 = vpop.f32.mrb[0].mxu0
        %1576 = vmatprep.mubr.f32.mxu0 0.0
        %v1577 = vand.u32 %v1319, 4294901760
        %1578 = vmatmul.mubr.f32.gmra.mrb[0].mxu0 %v1577
        %v1579 = vpop.f32.mrb[0].mxu0
        %v1580 = vadd.f32 %v1454, %v1579
        %v1581 = vpop.f32.mrb[0].mxu0
        %1582 = vmatprep.mubr.f32.mxu0 0.0
        %v1583 = vand.u32 %v1322, 4294901760
        %1584 = vmatmul.mubr.f32.gmra.mrb[0].mxu0 %v1583
        %v1585 = vpop.f32.mrb[0].mxu0
        %v1586 = vadd.f32 %v1464, %v1585
        %v1587 = vpop.f32.mrb[0].mxu0
        %1588 = vmatprep.mubr.f32.mxu0 0.0
        %v1589 = vand.u32 %v1325, 4294901760
        %1590 = vmatmul.mubr.f32.gmra.mrb[0].mxu0 %v1589
        %v1591 = vpop.f32.mrb[0].mxu0
        %v1592 = vadd.f32 %v1474, %v1591
        %v1593 = vpop.f32.mrb[0].mxu0
        %1594 = vdwg.mxu0
        %1595 = vmatprep.subr.mxu0 0.0
        %v1596 = vand.u32 %v1329, 4294901760
        %v1597 = vsub.f32 %v1329, %v1596
        %1598 = vmatpush1.msra.mxu0 %v1597
        %1599 = vmatprep.subr.mxu0 0.0
        %1600 = vmatpush1.msra.mxu0 0.0
        %1601 = vmatprep.subr.mxu0 0.0
        %1602 = vmatpush1.msra.mxu0 0.0
        %1603 = vmatprep.subr.mxu0 0.0
        %1604 = vmatpush1.msra.mxu0 0.0
        %1605 = vmatprep.subr.mxu0 0.0
        %1606 = vmatpush1.msra.mxu0 0.0
        %1607 = vmatprep.subr.mxu0 0.0
        %1608 = vmatpush1.msra.mxu0 0.0
        %1609 = vmatprep.subr.mxu0 0.0
        %1610 = vmatpush1.msra.mxu0 0.0
        %1611 = vmatprep.subr.mxu0 0.0
        %1612 = vmatpush1.msra.mxu0 0.0
        %1613 = vmatprep.subr.mxu0 0.0
        %1614 = vmatpush1.msra.mxu0 0.0
        %1615 = vmatprep.subr.mxu0 0.0
        %1616 = vmatpush1.msra.mxu0 0.0
        %1617 = vmatprep.subr.mxu0 0.0
        %1618 = vmatpush1.msra.mxu0 0.0
        %1619 = vmatprep.subr.mxu0 0.0
        %1620 = vmatpush1.msra.mxu0 0.0
        %1621 = vmatprep.subr.mxu0 0.0
        %1622 = vmatpush1.msra.mxu0 0.0
        %1623 = vmatprep.subr.mxu0 0.0
        %1624 = vmatpush1.msra.mxu0 0.0
        %1625 = vmatprep.subr.mxu0 0.0
        %1626 = vmatpush1.msra.mxu0 0.0
        %1627 = vmatprep.subr.mxu0 0.0
        %1628 = vmatpush1.msra.mxu0 0.0
        %1629 = vmatprep.subr.mxu0 0.0
        %1630 = vmatpush1.msra.mxu0 0.0
        %1631 = vmatprep.subr.mxu0 0.0
        %1632 = vmatpush1.msra.mxu0 0.0
        %1633 = vmatprep.subr.mxu0 0.0
        %1634 = vmatpush1.msra.mxu0 0.0
        %1635 = vmatprep.subr.mxu0 0.0
        %1636 = vmatpush1.msra.mxu0 0.0
        %1637 = vmatprep.subr.mxu0 0.0
        %1638 = vmatpush1.msra.mxu0 0.0
        %1639 = vmatprep.subr.mxu0 0.0
        %1640 = vmatpush1.msra.mxu0 0.0
        %1641 = vmatprep.subr.mxu0 0.0
        %1642 = vmatpush1.msra.mxu0 0.0
        %1643 = vmatprep.subr.mxu0 0.0
        %1644 = vmatpush1.msra.mxu0 0.0
        %1645 = vmatprep.subr.mxu0 0.0
        %1646 = vmatpush1.msra.mxu0 0.0
        %1647 = vmatprep.subr.mxu0 0.0
        %1648 = vmatpush1.msra.mxu0 0.0
        %1649 = vmatprep.subr.mxu0 0.0
        %1650 = vmatpush1.msra.mxu0 0.0
        %1651 = vmatprep.subr.mxu0 0.0
        %1652 = vmatpush1.msra.mxu0 0.0
        %1653 = vmatprep.subr.mxu0 0.0
        %1654 = vmatpush1.msra.mxu0 0.0
        %1655 = vmatprep.subr.mxu0 0.0
        %1656 = vmatpush1.msra.mxu0 0.0
        %1657 = vmatprep.subr.mxu0 0.0
        %1658 = vmatpush1.msra.mxu0 0.0
        %1659 = vmatprep.subr.mxu0 0.0
        %1660 = vmatpush1.msra.mxu0 0.0
        %1661 = vmatprep.mubr.f32.mxu0 0.0
        %v1662 = vand.u32 %v1304, 4294901760
        %v1663 = vsub.f32 %v1304, %v1662
        %1664 = vmatmul.mubr.f32.gmra.mrb[0].mxu0 %v1663
        %v1665 = vpop.f32.mrb[0].mxu0
        %v1666 = vadd.f32 %v1550, %v1665
        %v1667 = vpop.f32.mrb[0].mxu0
        %1668 = vmatprep.mubr.f32.mxu0 0.0
        %v1669 = vand.u32 %v1307, 4294901760
        %v1670 = vsub.f32 %v1307, %v1669
        %1671 = vmatmul.mubr.f32.gmra.mrb[0].mxu0 %v1670
        %v1672 = vpop.f32.mrb[0].mxu0
        %v1673 = vadd.f32 %v1556, %v1672
        %v1674 = vpop.f32.mrb[0].mxu0
        %1675 = vmatprep.mubr.f32.mxu0 0.0
        %v1676 = vand.u32 %v1310, 4294901760
        %v1677 = vsub.f32 %v1310, %v1676
        %1678 = vmatmul.mubr.f32.gmra.mrb[0].mxu0 %v1677
        %v1679 = vpop.f32.mrb[0].mxu0
        %v1680 = vadd.f32 %v1562, %v1679
        %v1681 = vpop.f32.mrb[0].mxu0
        %1682 = vmatprep.mubr.f32.mxu0 0.0
        %v1683 = vand.u32 %v1313, 4294901760
        %v1684 = vsub.f32 %v1313, %v1683
        %1685 = vmatmul.mubr.f32.gmra.mrb[0].mxu0 %v1684
        %v1686 = vpop.f32.mrb[0].mxu0
        %v1687 = vadd.f32 %v1568, %v1686
        %v1688 = vpop.f32.mrb[0].mxu0
        %1689 = vmatprep.mubr.f32.mxu0 0.0
        %v1690 = vand.u32 %v1316, 4294901760
        %v1691 = vsub.f32 %v1316, %v1690
        %1692 = vmatmul.mubr.f32.gmra.mrb[0].mxu0 %v1691
        %v1693 = vpop.f32.mrb[0].mxu0
        %v1694 = vadd.f32 %v1574, %v1693
        %v1695 = vpop.f32.mrb[0].mxu0
        %1696 = vmatprep.mubr.f32.mxu0 0.0
        %v1697 = vand.u32 %v1319, 4294901760
        %v1698 = vsub.f32 %v1319, %v1697
        %1699 = vmatmul.mubr.f32.gmra.mrb[0].mxu0 %v1698
        %v1700 = vpop.f32.mrb[0].mxu0
        %v1701 = vadd.f32 %v1580, %v1700
        %v1702 = vpop.f32.mrb[0].mxu0
        %1703 = vmatprep.mubr.f32.mxu0 0.0
        %v1704 = vand.u32 %v1322, 4294901760
        %v1705 = vsub.f32 %v1322, %v1704
        %1706 = vmatmul.mubr.f32.gmra.mrb[0].mxu0 %v1705
        %v1707 = vpop.f32.mrb[0].mxu0
        %v1708 = vadd.f32 %v1586, %v1707
        %v1709 = vpop.f32.mrb[0].mxu0
        %1710 = vmatprep.mubr.f32.mxu0 0.0
        %v1711 = vand.u32 %v1325, 4294901760
        %v1712 = vsub.f32 %v1325, %v1711
        %1713 = vmatmul.mubr.f32.gmra.mrb[0].mxu0 %v1712
        %v1714 = vpop.f32.mrb[0].mxu0
        %v1715 = vadd.f32 %v1592, %v1714
        %v1716 = vpop.f32.mrb[0].mxu0
        %1717 = vdwg.mxu0
        %1718 = vmatprep.subr.mxu0 0.0
        %v1719 = vand.u32 %v1329, 4294901760
        %1720 = vmatpush1.msra.mxu0 %v1719
        %1721 = vmatprep.subr.mxu0 0.0
        %1722 = vmatpush1.msra.mxu0 0.0
        %1723 = vmatprep.subr.mxu0 0.0
        %1724 = vmatpush1.msra.mxu0 0.0
        %1725 = vmatprep.subr.mxu0 0.0
        %1726 = vmatpush1.msra.mxu0 0.0
        %1727 = vmatprep.subr.mxu0 0.0
        %1728 = vmatpush1.msra.mxu0 0.0
        %1729 = vmatprep.subr.mxu0 0.0
        %1730 = vmatpush1.msra.mxu0 0.0
        %1731 = vmatprep.subr.mxu0 0.0
        %1732 = vmatpush1.msra.mxu0 0.0
        %1733 = vmatprep.subr.mxu0 0.0
        %1734 = vmatpush1.msra.mxu0 0.0
        %1735 = vmatprep.subr.mxu0 0.0
        %1736 = vmatpush1.msra.mxu0 0.0
        %1737 = vmatprep.subr.mxu0 0.0
        %1738 = vmatpush1.msra.mxu0 0.0
        %1739 = vmatprep.subr.mxu0 0.0
        %1740 = vmatpush1.msra.mxu0 0.0
        %1741 = vmatprep.subr.mxu0 0.0
        %1742 = vmatpush1.msra.mxu0 0.0
        %1743 = vmatprep.subr.mxu0 0.0
        %1744 = vmatpush1.msra.mxu0 0.0
        %1745 = vmatprep.subr.mxu0 0.0
        %1746 = vmatpush1.msra.mxu0 0.0
        %1747 = vmatprep.subr.mxu0 0.0
        %1748 = vmatpush1.msra.mxu0 0.0
        %1749 = vmatprep.subr.mxu0 0.0
        %1750 = vmatpush1.msra.mxu0 0.0
        %1751 = vmatprep.subr.mxu0 0.0
        %1752 = vmatpush1.msra.mxu0 0.0
        %1753 = vmatprep.subr.mxu0 0.0
        %1754 = vmatpush1.msra.mxu0 0.0
        %1755 = vmatprep.subr.mxu0 0.0
        %1756 = vmatpush1.msra.mxu0 0.0
        %1757 = vmatprep.subr.mxu0 0.0
        %1758 = vmatpush1.msra.mxu0 0.0
        %1759 = vmatprep.subr.mxu0 0.0
        %1760 = vmatpush1.msra.mxu0 0.0
        %1761 = vmatprep.subr.mxu0 0.0
        %1762 = vmatpush1.msra.mxu0 0.0
        %1763 = vmatprep.subr.mxu0 0.0
        %1764 = vmatpush1.msra.mxu0 0.0
        %1765 = vmatprep.subr.mxu0 0.0
        %1766 = vmatpush1.msra.mxu0 0.0
        %1767 = vmatprep.subr.mxu0 0.0
        %1768 = vmatpush1.msra.mxu0 0.0
        %1769 = vmatprep.subr.mxu0 0.0
        %1770 = vmatpush1.msra.mxu0 0.0
        %1771 = vmatprep.subr.mxu0 0.0
        %1772 = vmatpush1.msra.mxu0 0.0
        %1773 = vmatprep.subr.mxu0 0.0
        %1774 = vmatpush1.msra.mxu0 0.0
        %1775 = vmatprep.subr.mxu0 0.0
        %1776 = vmatpush1.msra.mxu0 0.0
        %1777 = vmatprep.subr.mxu0 0.0
        %1778 = vmatpush1.msra.mxu0 0.0
        %1779 = vmatprep.subr.mxu0 0.0
        %1780 = vmatpush1.msra.mxu0 0.0
        %1781 = vmatprep.subr.mxu0 0.0
        %1782 = vmatpush1.msra.mxu0 0.0
        %1783 = vmatprep.mubr.f32.mxu0 0.0
        %v1784 = vand.u32 %v1304, 4294901760
        %v1785 = vsub.f32 %v1304, %v1784
        %v1786 = vand.u32 %v1785, 4294901760
        %1787 = vmatmul.mubr.f32.gmra.mrb[0].mxu0 %v1786
        %v1788 = vpop.f32.mrb[0].mxu0
        %v1789 = vadd.f32 %v1666, %v1788
        %v1790 = vpop.f32.mrb[0].mxu0
        %1791 = vmatprep.mubr.f32.mxu0 0.0
        %v1792 = vand.u32 %v1307, 4294901760
        %v1793 = vsub.f32 %v1307, %v1792
        %v1794 = vand.u32 %v1793, 4294901760
        %1795 = vmatmul.mubr.f32.gmra.mrb[0].mxu0 %v1794
        %v1796 = vpop.f32.mrb[0].mxu0
        %v1797 = vadd.f32 %v1673, %v1796
        %v1798 = vpop.f32.mrb[0].mxu0
        %1799 = vmatprep.mubr.f32.mxu0 0.0
        %v1800 = vand.u32 %v1310, 4294901760
        %v1801 = vsub.f32 %v1310, %v1800
        %v1802 = vand.u32 %v1801, 4294901760
        %1803 = vmatmul.mubr.f32.gmra.mrb[0].mxu0 %v1802
        %v1804 = vpop.f32.mrb[0].mxu0
        %v1805 = vadd.f32 %v1680, %v1804
        %v1806 = vpop.f32.mrb[0].mxu0
        %1807 = vmatprep.mubr.f32.mxu0 0.0
        %v1808 = vand.u32 %v1313, 4294901760
        %v1809 = vsub.f32 %v1313, %v1808
        %v1810 = vand.u32 %v1809, 4294901760
        %1811 = vmatmul.mubr.f32.gmra.mrb[0].mxu0 %v1810
        %v1812 = vpop.f32.mrb[0].mxu0
        %v1813 = vadd.f32 %v1687, %v1812
        %v1814 = vpop.f32.mrb[0].mxu0
        %1815 = vmatprep.mubr.f32.mxu0 0.0
        %v1816 = vand.u32 %v1316, 4294901760
        %v1817 = vsub.f32 %v1316, %v1816
        %v1818 = vand.u32 %v1817, 4294901760
        %1819 = vmatmul.mubr.f32.gmra.mrb[0].mxu0 %v1818
        %v1820 = vpop.f32.mrb[0].mxu0
        %v1821 = vadd.f32 %v1694, %v1820
        %v1822 = vpop.f32.mrb[0].mxu0
        %1823 = vmatprep.mubr.f32.mxu0 0.0
        %v1824 = vand.u32 %v1319, 4294901760
        %v1825 = vsub.f32 %v1319, %v1824
        %v1826 = vand.u32 %v1825, 4294901760
        %1827 = vmatmul.mubr.f32.gmra.mrb[0].mxu0 %v1826
        %v1828 = vpop.f32.mrb[0].mxu0
        %v1829 = vadd.f32 %v1701, %v1828
        %v1830 = vpop.f32.mrb[0].mxu0
        %1831 = vmatprep.mubr.f32.mxu0 0.0
        %v1832 = vand.u32 %v1322, 4294901760
        %v1833 = vsub.f32 %v1322, %v1832
        %v1834 = vand.u32 %v1833, 4294901760
        %1835 = vmatmul.mubr.f32.gmra.mrb[0].mxu0 %v1834
        %v1836 = vpop.f32.mrb[0].mxu0
        %v1837 = vadd.f32 %v1708, %v1836
        %v1838 = vpop.f32.mrb[0].mxu0
        %1839 = vmatprep.mubr.f32.mxu0 0.0
        %v1840 = vand.u32 %v1325, 4294901760
        %v1841 = vsub.f32 %v1325, %v1840
        %v1842 = vand.u32 %v1841, 4294901760
        %1843 = vmatmul.mubr.f32.gmra.mrb[0].mxu0 %v1842
        %v1844 = vpop.f32.mrb[0].mxu0
        %v1845 = vadd.f32 %v1715, %v1844
        %v1846 = vpop.f32.mrb[0].mxu0
        %1847 = vdwg.mxu0
        %1848 = vmatprep.subr.mxu0 0.0
        %v1849 = vand.u32 %v1329, 4294901760
        %v1850 = vsub.f32 %v1329, %v1849
        %v1851 = vand.u32 %v1850, 4294901760
        %1852 = vmatpush1.msra.mxu0 %v1851
        %1853 = vmatprep.subr.mxu0 0.0
        %1854 = vmatpush1.msra.mxu0 0.0
        %1855 = vmatprep.subr.mxu0 0.0
        %1856 = vmatpush1.msra.mxu0 0.0
        %1857 = vmatprep.subr.mxu0 0.0
        %1858 = vmatpush1.msra.mxu0 0.0
        %1859 = vmatprep.subr.mxu0 0.0
        %1860 = vmatpush1.msra.mxu0 0.0
        %1861 = vmatprep.subr.mxu0 0.0
        %1862 = vmatpush1.msra.mxu0 0.0
        %1863 = vmatprep.subr.mxu0 0.0
        %1864 = vmatpush1.msra.mxu0 0.0
        %1865 = vmatprep.subr.mxu0 0.0
        %1866 = vmatpush1.msra.mxu0 0.0
        %1867 = vmatprep.subr.mxu0 0.0
        %1868 = vmatpush1.msra.mxu0 0.0
        %1869 = vmatprep.subr.mxu0 0.0
        %1870 = vmatpush1.msra.mxu0 0.0
        %1871 = vmatprep.subr.mxu0 0.0
        %1872 = vmatpush1.msra.mxu0 0.0
        %1873 = vmatprep.subr.mxu0 0.0
        %1874 = vmatpush1.msra.mxu0 0.0
        %1875 = vmatprep.subr.mxu0 0.0
        %1876 = vmatpush1.msra.mxu0 0.0
        %1877 = vmatprep.subr.mxu0 0.0
        %1878 = vmatpush1.msra.mxu0 0.0
        %1879 = vmatprep.subr.mxu0 0.0
        %1880 = vmatpush1.msra.mxu0 0.0
        %1881 = vmatprep.subr.mxu0 0.0
        %1882 = vmatpush1.msra.mxu0 0.0
        %1883 = vmatprep.subr.mxu0 0.0
        %1884 = vmatpush1.msra.mxu0 0.0
        %1885 = vmatprep.subr.mxu0 0.0
        %1886 = vmatpush1.msra.mxu0 0.0
        %1887 = vmatprep.subr.mxu0 0.0
        %1888 = vmatpush1.msra.mxu0 0.0
        %1889 = vmatprep.subr.mxu0 0.0
        %1890 = vmatpush1.msra.mxu0 0.0
        %1891 = vmatprep.subr.mxu0 0.0
        %1892 = vmatpush1.msra.mxu0 0.0
        %1893 = vmatprep.subr.mxu0 0.0
        %1894 = vmatpush1.msra.mxu0 0.0
        %1895 = vmatprep.subr.mxu0 0.0
        %1896 = vmatpush1.msra.mxu0 0.0
        %1897 = vmatprep.subr.mxu0 0.0
        %1898 = vmatpush1.msra.mxu0 0.0
        %1899 = vmatprep.subr.mxu0 0.0
        %1900 = vmatpush1.msra.mxu0 0.0
        %1901 = vmatprep.subr.mxu0 0.0
        %1902 = vmatpush1.msra.mxu0 0.0
        %1903 = vmatprep.subr.mxu0 0.0
        %1904 = vmatpush1.msra.mxu0 0.0
        %1905 = vmatprep.subr.mxu0 0.0
        %1906 = vmatpush1.msra.mxu0 0.0
        %1907 = vmatprep.subr.mxu0 0.0
        %1908 = vmatpush1.msra.mxu0 0.0
        %1909 = vmatprep.subr.mxu0 0.0
        %1910 = vmatpush1.msra.mxu0 0.0
        %1911 = vmatprep.subr.mxu0 0.0
        %1912 = vmatpush1.msra.mxu0 0.0
        %1913 = vmatprep.subr.mxu0 0.0
        %1914 = vmatpush1.msra.mxu0 0.0
        %1915 = vmatprep.mubr.f32.mxu0 0.0
        %v1916 = vand.u32 %v1304, 4294901760
        %1917 = vmatmul.mubr.f32.gmra.mrb[0].mxu0 %v1916
        %v1918 = vpop.f32.mrb[0].mxu0
        %v1919 = vadd.f32 %v1789, %v1918
        %v1920 = vpop.f32.mrb[0].mxu0
        %1921 = vmatprep.mubr.f32.mxu0 0.0
        %v1922 = vand.u32 %v1307, 4294901760
        %1923 = vmatmul.mubr.f32.gmra.mrb[0].mxu0 %v1922
        %v1924 = vpop.f32.mrb[0].mxu0
        %v1925 = vadd.f32 %v1797, %v1924
        %v1926 = vpop.f32.mrb[0].mxu0
        %1927 = vmatprep.mubr.f32.mxu0 0.0
        %v1928 = vand.u32 %v1310, 4294901760
        %1929 = vmatmul.mubr.f32.gmra.mrb[0].mxu0 %v1928
        %v1930 = vpop.f32.mrb[0].mxu0
        %v1931 = vadd.f32 %v1805, %v1930
        %v1932 = vpop.f32.mrb[0].mxu0
        %1933 = vmatprep.mubr.f32.mxu0 0.0
        %v1934 = vand.u32 %v1313, 4294901760
        %1935 = vmatmul.mubr.f32.gmra.mrb[0].mxu0 %v1934
        %v1936 = vpop.f32.mrb[0].mxu0
        %v1937 = vadd.f32 %v1813, %v1936
        %v1938 = vpop.f32.mrb[0].mxu0
        %1939 = vmatprep.mubr.f32.mxu0 0.0
        %v1940 = vand.u32 %v1316, 4294901760
        %1941 = vmatmul.mubr.f32.gmra.mrb[0].mxu0 %v1940
        %v1942 = vpop.f32.mrb[0].mxu0
        %v1943 = vadd.f32 %v1821, %v1942
        %v1944 = vpop.f32.mrb[0].mxu0
        %1945 = vmatprep.mubr.f32.mxu0 0.0
        %v1946 = vand.u32 %v1319, 4294901760
        %1947 = vmatmul.mubr.f32.gmra.mrb[0].mxu0 %v1946
        %v1948 = vpop.f32.mrb[0].mxu0
        %v1949 = vadd.f32 %v1829, %v1948
        %v1950 = vpop.f32.mrb[0].mxu0
        %1951 = vmatprep.mubr.f32.mxu0 0.0
        %v1952 = vand.u32 %v1322, 4294901760
        %1953 = vmatmul.mubr.f32.gmra.mrb[0].mxu0 %v1952
        %v1954 = vpop.f32.mrb[0].mxu0
        %v1955 = vadd.f32 %v1837, %v1954
        %v1956 = vpop.f32.mrb[0].mxu0
        %1957 = vmatprep.mubr.f32.mxu0 0.0
        %v1958 = vand.u32 %v1325, 4294901760
        %1959 = vmatmul.mubr.f32.gmra.mrb[0].mxu0 %v1958
        %v1960 = vpop.f32.mrb[0].mxu0
        %v1961 = vadd.f32 %v1845, %v1960
        %v1962 = vpop.f32.mrb[0].mxu0
        %1963 = vdwg.mxu0
        %1964 = vmatprep.subr.mxu0 0.0
        %v1965 = vand.u32 %v1329, 4294901760
        %1966 = vmatpush1.msra.mxu0 %v1965
        %1967 = vmatprep.subr.mxu0 0.0
        %1968 = vmatpush1.msra.mxu0 0.0
        %1969 = vmatprep.subr.mxu0 0.0
        %1970 = vmatpush1.msra.mxu0 0.0
        %1971 = vmatprep.subr.mxu0 0.0
        %1972 = vmatpush1.msra.mxu0 0.0
        %1973 = vmatprep.subr.mxu0 0.0
        %1974 = vmatpush1.msra.mxu0 0.0
        %1975 = vmatprep.subr.mxu0 0.0
        %1976 = vmatpush1.msra.mxu0 0.0
        %1977 = vmatprep.subr.mxu0 0.0
        %1978 = vmatpush1.msra.mxu0 0.0
        %1979 = vmatprep.subr.mxu0 0.0
        %1980 = vmatpush1.msra.mxu0 0.0
        %1981 = vmatprep.subr.mxu0 0.0
        %1982 = vmatpush1.msra.mxu0 0.0
        %1983 = vmatprep.subr.mxu0 0.0
        %1984 = vmatpush1.msra.mxu0 0.0
        %1985 = vmatprep.subr.mxu0 0.0
        %1986 = vmatpush1.msra.mxu0 0.0
        %1987 = vmatprep.subr.mxu0 0.0
        %1988 = vmatpush1.msra.mxu0 0.0
        %1989 = vmatprep.subr.mxu0 0.0
        %1990 = vmatpush1.msra.mxu0 0.0
        %1991 = vmatprep.subr.mxu0 0.0
        %1992 = vmatpush1.msra.mxu0 0.0
        %1993 = vmatprep.subr.mxu0 0.0
        %1994 = vmatpush1.msra.mxu0 0.0
        %1995 = vmatprep.subr.mxu0 0.0
        %1996 = vmatpush1.msra.mxu0 0.0
        %1997 = vmatprep.subr.mxu0 0.0
        %1998 = vmatpush1.msra.mxu0 0.0
        %1999 = vmatprep.subr.mxu0 0.0
        %2000 = vmatpush1.msra.mxu0 0.0
        %2001 = vmatprep.subr.mxu0 0.0
        %2002 = vmatpush1.msra.mxu0 0.0
        %2003 = vmatprep.subr.mxu0 0.0
        %2004 = vmatpush1.msra.mxu0 0.0
        %2005 = vmatprep.subr.mxu0 0.0
        %2006 = vmatpush1.msra.mxu0 0.0
        %2007 = vmatprep.subr.mxu0 0.0
        %2008 = vmatpush1.msra.mxu0 0.0
        %2009 = vmatprep.subr.mxu0 0.0
        %2010 = vmatpush1.msra.mxu0 0.0
        %2011 = vmatprep.subr.mxu0 0.0
        %2012 = vmatpush1.msra.mxu0 0.0
        %2013 = vmatprep.subr.mxu0 0.0
        %2014 = vmatpush1.msra.mxu0 0.0
        %2015 = vmatprep.subr.mxu0 0.0
        %2016 = vmatpush1.msra.mxu0 0.0
        %2017 = vmatprep.subr.mxu0 0.0
        %2018 = vmatpush1.msra.mxu0 0.0
        %2019 = vmatprep.subr.mxu0 0.0
        %2020 = vmatpush1.msra.mxu0 0.0
        %2021 = vmatprep.subr.mxu0 0.0
        %2022 = vmatpush1.msra.mxu0 0.0
        %2023 = vmatprep.subr.mxu0 0.0
        %2024 = vmatpush1.msra.mxu0 0.0
        %2025 = vmatprep.subr.mxu0 0.0
        %2026 = vmatpush1.msra.mxu0 0.0
        %2027 = vmatprep.subr.mxu0 0.0
        %2028 = vmatpush1.msra.mxu0 0.0
        %2029 = vmatprep.mubr.f32.mxu0 0.0
        %v2030 = vand.u32 %v1304, 4294901760
        %2031 = vmatmul.mubr.f32.gmra.mrb[0].mxu0 %v2030
        %v2032 = vpop.f32.mrb[0].mxu0
        %v2033 = vadd.f32 %v1919, %v2032
        %v2034 = vpop.f32.mrb[0].mxu0
        %2035 = vmatprep.mubr.f32.mxu0 0.0
        %v2036 = vand.u32 %v1307, 4294901760
        %2037 = vmatmul.mubr.f32.gmra.mrb[0].mxu0 %v2036
        %v2038 = vpop.f32.mrb[0].mxu0
        %v2039 = vadd.f32 %v1925, %v2038
        %v2040 = vpop.f32.mrb[0].mxu0
        %2041 = vmatprep.mubr.f32.mxu0 0.0
        %v2042 = vand.u32 %v1310, 4294901760
        %2043 = vmatmul.mubr.f32.gmra.mrb[0].mxu0 %v2042
        %v2044 = vpop.f32.mrb[0].mxu0
        %v2045 = vadd.f32 %v1931, %v2044
        %v2046 = vpop.f32.mrb[0].mxu0
        %2047 = vmatprep.mubr.f32.mxu0 0.0
        %v2048 = vand.u32 %v1313, 4294901760
        %2049 = vmatmul.mubr.f32.gmra.mrb[0].mxu0 %v2048
        %v2050 = vpop.f32.mrb[0].mxu0
        %v2051 = vadd.f32 %v1937, %v2050
        %v2052 = vpop.f32.mrb[0].mxu0
        %2053 = vmatprep.mubr.f32.mxu0 0.0
        %v2054 = vand.u32 %v1316, 4294901760
        %2055 = vmatmul.mubr.f32.gmra.mrb[0].mxu0 %v2054
        %v2056 = vpop.f32.mrb[0].mxu0
        %v2057 = vadd.f32 %v1943, %v2056
        %v2058 = vpop.f32.mrb[0].mxu0
        %2059 = vmatprep.mubr.f32.mxu0 0.0
        %v2060 = vand.u32 %v1319, 4294901760
        %2061 = vmatmul.mubr.f32.gmra.mrb[0].mxu0 %v2060
        %v2062 = vpop.f32.mrb[0].mxu0
        %v2063 = vadd.f32 %v1949, %v2062
        %v2064 = vpop.f32.mrb[0].mxu0
        %2065 = vmatprep.mubr.f32.mxu0 0.0
        %v2066 = vand.u32 %v1322, 4294901760
        %2067 = vmatmul.mubr.f32.gmra.mrb[0].mxu0 %v2066
        %v2068 = vpop.f32.mrb[0].mxu0
        %v2069 = vadd.f32 %v1955, %v2068
        %v2070 = vpop.f32.mrb[0].mxu0
        %2071 = vmatprep.mubr.f32.mxu0 0.0
        %v2072 = vand.u32 %v1325, 4294901760
        %2073 = vmatmul.mubr.f32.gmra.mrb[0].mxu0 %v2072
        %v2074 = vpop.f32.mrb[0].mxu0
        %v2075 = vadd.f32 %v1961, %v2074
        %v2076 = vpop.f32.mrb[0].mxu0
        %2077 = vdwg.mxu0
        %v2079 = vlaneseq
        %v2080 = vshrl.u32 %v2079, 7
        %v2081 = vsub.s32 0, %v2080
        %v2082 = vrot.slane %v319, %v2081
        %v2084 = vmul.f32 %v2082, %v2033
        %v2085 = vmul.f32 %v2082, %v2039
        %v2086 = vmul.f32 %v2082, %v2045
        %v2087 = vmul.f32 %v2082, %v2051
        %v2088 = vmul.f32 %v2082, %v2057
        %v2089 = vmul.f32 %v2082, %v2063
        %v2090 = vmul.f32 %v2082, %v2069
        %v2091 = vmul.f32 %v2082, %v2075
        %v2092 = vadd.f32 %v310, %v2084
        %v2093 = vadd.f32 %v311, %v2085
        %v2094 = vadd.f32 %v312, %v2086
        %v2095 = vadd.f32 %v313, %v2087
        %v2096 = vadd.f32 %v314, %v2088
        %v2097 = vadd.f32 %v315, %v2089
        %v2098 = vadd.f32 %v316, %v2090
        %v2099 = vadd.f32 %v317, %v2091
        %2100 = vst [vmem:[%s287] sm:$0xff] %v2092
        %2101 = vst [vmem:[%s287 + $0x8] sm:$0xff] %v2093
        %2102 = vst [vmem:[%s287 + $0x10] sm:$0xff] %v2094
        %2103 = vst [vmem:[%s287 + $0x18] sm:$0xff] %v2095
        %2104 = vst [vmem:[%s287 + $0x20] sm:$0xff] %v2096
        %2105 = vst [vmem:[%s287 + $0x28] sm:$0xff] %v2097
        %2106 = vst [vmem:[%s287 + $0x30] sm:$0xff] %v2098
        %2107 = vst [vmem:[%s287 + $0x38] sm:$0xff] %v2099
        %v2108 = vmul.f32 %v1293, %v1293
        %v2109 = vmul.f32 %v1294, %v1294
        %v2110 = vmul.f32 %v1295, %v1295
        %v2111 = vmul.f32 %v1296, %v1296
        %v2112 = vmul.f32 %v1297, %v1297
        %v2113 = vmul.f32 %v1298, %v1298
        %v2114 = vmul.f32 %v1299, %v1299
        %v2115 = vmul.f32 %v1300, %v1300
        %v2116 = vsub.f32 1.0, %v2108
        %v2117 = vsub.f32 1.0, %v2109
        %v2118 = vsub.f32 1.0, %v2110
        %v2119 = vsub.f32 1.0, %v2111
        %v2120 = vsub.f32 1.0, %v2112
        %v2121 = vsub.f32 1.0, %v2113
        %v2122 = vsub.f32 1.0, %v2114
        %v2123 = vsub.f32 1.0, %v2115
        %v2124 = vstv %s309
        %v2125 = vmul.f32 %v2116, %v2124
        %v2126 = vmul.f32 %v2117, %v2124
        %v2127 = vmul.f32 %v2118, %v2124
        %v2128 = vmul.f32 %v2119, %v2124
        %v2129 = vmul.f32 %v2120, %v2124
        %v2130 = vmul.f32 %v2121, %v2124
        %v2131 = vmul.f32 %v2122, %v2124
        %v2132 = vmul.f32 %v2123, %v2124
        %v2133 = vadd.f32 %v2125, 1.0
        %v2134 = vadd.f32 %v2126, 1.0
        %v2135 = vadd.f32 %v2127, 1.0
        %v2136 = vadd.f32 %v2128, 1.0
        %v2137 = vadd.f32 %v2129, 1.0
        %v2138 = vadd.f32 %v2130, 1.0
        %v2139 = vadd.f32 %v2131, 1.0
        %v2140 = vadd.f32 %v2132, 1.0
        %v2141 = vand.u32 2147483647, %v2133
        %v2142 = vand.u32 2147483647, %v2134
        %v2143 = vand.u32 2147483647, %v2135
        %v2144 = vand.u32 2147483647, %v2136
        %v2145 = vand.u32 2147483647, %v2137
        %v2146 = vand.u32 2147483647, %v2138
        %v2147 = vand.u32 2147483647, %v2139
        %v2148 = vand.u32 2147483647, %v2140
        %v2149 = vlog2.pop %v2141
        %v2150 = vmul.f32 %v2149, 0.6931472
        %v2151 = vlog2.pop %v2142
        %v2152 = vmul.f32 %v2151, 0.6931472
        %v2153 = vlog2.pop %v2143
        %v2154 = vmul.f32 %v2153, 0.6931472
        %v2155 = vlog2.pop %v2144
        %v2156 = vmul.f32 %v2155, 0.6931472
        %v2157 = vlog2.pop %v2145
        %v2158 = vmul.f32 %v2157, 0.6931472
        %v2159 = vlog2.pop %v2146
        %v2160 = vmul.f32 %v2159, 0.6931472
        %v2161 = vlog2.pop %v2147
        %v2162 = vmul.f32 %v2161, 0.6931472
        %v2163 = vlog2.pop %v2148
        %v2164 = vmul.f32 %v2163, 0.6931472
        %2165 = vst.msk [vmem:[%s306] sm:$0xff] %vm1302, %v2150
        %2166 = vst.msk [vmem:[%s306 + $0x8] sm:$0xff] %vm1302, %v2152
        %2167 = vst.msk [vmem:[%s306 + $0x10] sm:$0xff] %vm1302, %v2154
        %2168 = vst.msk [vmem:[%s306 + $0x18] sm:$0xff] %vm1302, %v2156
        %2169 = vst.msk [vmem:[%s306 + $0x20] sm:$0xff] %vm1302, %v2158
        %2170 = vst.msk [vmem:[%s306 + $0x28] sm:$0xff] %vm1302, %v2160
        %2171 = vst.msk [vmem:[%s306 + $0x30] sm:$0xff] %vm1302, %v2162
        %2172 = vst.msk [vmem:[%s306 + $0x38] sm:$0xff] %vm1302, %v2164
        %s2173 = sand.u32 %s162, 1
        %s2174 = scalar_lea.sflag [#allocation3], %s2173
        %s2175 = sand.u32 %s162, 1
        %s2176 = smul.addr %s2175, 64
        %s2177 = scalar_lea.vmem [#allocation5], %s2176
        %s2178 = smul.u32 8, %s23
        %p2179 = scmp.lt.s32.totalorder %s2178, 15
        %s2180 = scalar_select %p2179, %s2178, 15
        %s2181 = smul.addr %s2180, 8
        %s2182 = scalar_lea.vmem %s7, %s2181
        // Predicated region
        $region49: #{tpu_custom_call.1} parent=43 // pred_check
          %p2183 = pneg %p172
        $region50: #{tpu_custom_call.1} parent=43 // pred_check_branch
          %2185 = sbr.rel (%p2183) target = $region52
        $region51: #{tpu_custom_call.1} parent=43 // pred_region
          %s2186 = smul.u32 8, %s23
          %s2188 = ssub.s32 1024, 1024
          %2189 = vsyncadd %s2174, %s2188
          %s2190 = smul.addr %s2186, 128
          %s2191 = scalar_lea.hbm %s6, %s2190
          %s2192 = sshll.u32 %s2177, 4
          %s2193 = int_to_ptr.vmem [resolvable:$true] %s2192
          %2198 = dma.vmem_to_hbm [thread:$0]  %s2193, 1024, %s2191, %s2174, 128, 128, 8
        $region52: #{tpu_custom_call.1} parent=43 // pred_fallthru
          _
        // Predicated region
        $region53: #{tpu_custom_call.1} parent=43 // pred_check
          %p2199 = pneg %p198
        $region54: #{tpu_custom_call.1} parent=43 // pred_check_branch
          %2201 = sbr.rel (%p2199) target = $region56
        $region55: #{tpu_custom_call.1} parent=43 // pred_region
          %s2202 = smul.u32 8, %s23
        $region56: #{tpu_custom_call.1} parent=43 // pred_fallthru
          _
      $region44: #{tpu_custom_call.1} parent=5 // pred_fallthru
        _
      %p2203 = scmp.le.s32.totalorder 2, %s18
      // Predicated region
      $region57: #{tpu_custom_call.1} parent=5 // pred_check
        %p2204 = pneg %p2203
      $region58: #{tpu_custom_call.1} parent=5 // pred_check_branch
        %2206 = sbr.rel (%p2204) target = $region60
      $region59: #{tpu_custom_call.1} parent=5 // pred_region
        %s2207 = ssub.s32 %s18, 2
        // Predicated region
        $region61: #{tpu_custom_call.1} parent=59 // pred_check
          %p2208 = pneg %p178
        $region62: #{tpu_custom_call.1} parent=59 // pred_check_branch
          %2210 = sbr.rel (%p2208) target = $region64
        $region63: #{tpu_custom_call.1} parent=59 // pred_region
          %s2211 = sand.u32 %s163, 1
          %s2212 = scalar_lea.sflag [#allocation3], %s2211
          %s2213 = sand.u32 %s163, 1
          %s2214 = smul.addr %s2213, 64
          %s2215 = scalar_lea.vmem [#allocation5], %s2214
          %2216 = dma.done %s2212, 1024
        $region64: #{tpu_custom_call.1} parent=59 // pred_fallthru
          _
        // Predicated region
        $region65: #{tpu_custom_call.1} parent=59 // pred_check
          %p2217 = pneg %p204
        $region66: #{tpu_custom_call.1} parent=59 // pred_check_branch
          %2219 = sbr.rel (%p2217) target = $region68
        $region67: #{tpu_custom_call.1} parent=59 // pred_region
          %s2220 = smul.u32 8, %s24
          %p2221 = scmp.lt.s32.totalorder %s2220, 15
          %s2222 = scalar_select %p2221, %s2220, 15
          %s2223 = smul.addr %s2222, 8
          %s2224 = scalar_lea.vmem %s7, %s2223
        $region68: #{tpu_custom_call.1} parent=59 // pred_fallthru
          _
      $region60: #{tpu_custom_call.1} parent=5 // pred_fallthru
        _
    $region6: #{tpu_custom_call.1} parent=1 // loop_footer
      %s22 = sadd.s32 1, %s18
    $region7: #{tpu_custom_call.1} parent=1 // loop_footer_branch
      %17 = sbr.rel target = $region3
    $region8: #{tpu_custom_call.1} parent=1 // loop_exit
      _
    %2225 = vsyncpa [#allocation3], 1
    %s2226 = scalar_lea.sflag [#allocation3], 1
    %2227 = vsyncpa %s2226, 1
    %2228 = vsyncpa [#allocation4], 1
    %s2229 = scalar_lea.sflag [#allocation4], 1
    %2230 = vsyncpa %s2229, 1

</llo_original>
